<compile_context>
chip_gen: v6e
topology: v6e:2x2x1
jax: 0.10.0
libtpu: 0.0.40
codegen_flags: <defaults>
</compile_context>

<pallas_src>
import functools

import jax
import jax.numpy as jnp
import numpy as np
from jax.experimental import pallas as pl
from jax.experimental.pallas import tpu as pltpu


def _down_kernel(xs_ref, w_ref, b_ref, conv_ref, pool_ref, *, TH, W, Cin, Cout):
    """One (batch, row-tile) grid step.

    xs_ref   : (1, 1, TH+2, W+2, Cin)  halo'd row slab of the padded NHWC input
    w_ref    : (9*Cin, Cout)           conv weights, (kh, kw, cin) flattened
    b_ref    : (1, Cout)               conv bias (f32)
    conv_ref : (1, TH, W, Cout)        conv + ReLU output tile
    pool_ref : (1, TH//2, W//2, Cout)  2x2 / stride-2 max-pooled output tile
    """
    # --- im2col: gather the 9 shifted taps into one (TH*W, 9*Cin) operand ----
    taps = []
    for kh in range(3):
        for kw in range(3):
            taps.append(xs_ref[0, 0, kh:kh + TH, kw:kw + W, :])   # (TH, W, Cin)
    patch = jnp.concatenate(taps, axis=-1).reshape(TH * W, 9 * Cin)

    # --- single wide MXU matmul, f32 accumulation -----------------------------
    acc = jnp.dot(patch, w_ref[...], preferred_element_type=jnp.float32)
    acc = acc + b_ref[...]           # (1, Cout) broadcasts over the rows
    acc = jnp.maximum(acc, 0.0)      # ReLU in f32 (works on v5e's f32-only VPU)

    conv = acc.reshape(TH, W, Cout)
    conv_ref[0] = conv.astype(conv_ref.dtype)

    # --- 2x2 / stride-2 max pool as two pairwise maxima ----------------------
    cr = conv.reshape(TH // 2, 2, W, Cout)
    rows = jnp.maximum(cr[:, 0], cr[:, 1])              # (TH//2, W, Cout)
    rc = rows.reshape(TH // 2, W // 2, 2, Cout)
    pooled = jnp.maximum(rc[:, :, 0], rc[:, :, 1])      # (TH//2, W//2, Cout)
    pool_ref[0] = pooled.astype(pool_ref.dtype)


def _auto_row_tile(H, W, Cin, Cout, itemsize):
    """Largest even divisor of H whose per-tile working set stays modest."""
    budget = 3 * 2 ** 20   # ~3 MiB of per-tile values; safe on every chip
    for th in range(H, 1, -1):
        if H % th or th % 2:
            continue
        patch = th * W * 9 * Cin * max(itemsize, 4)
        acc = th * W * Cout * 4
        slab = (th + 2) * (W + 2) * Cin * itemsize
        if patch + acc + 2 * slab <= budget:
            return th
    return 2


def down_forward(x_nchw, w_oihw, b, *, row_tile=None):
    """Reproduces Down.forward: (maxpool(conv(x)), conv(x), conv(x).shape[2])."""
    N, Cin, H, W = x_nchw.shape
    Cout, Cin_w, KH, KW = w_oihw.shape
    assert (Cin_w, KH, KW) == (Cin, 3, 3)
    assert H % 2 == 0 and W % 2 == 0, "MaxPool2d(2, 2) needs even H, W"

    dtype = x_nchw.dtype
    itemsize = jnp.dtype(dtype).itemsize
    TH = row_tile if row_tile is not None else _auto_row_tile(H, W, Cin, Cout, itemsize)
    assert H % TH == 0 and TH % 2 == 0
    nH = H // TH

    # Layout glue in XLA: NCHW -> NHWC, zero-pad the 3x3 halo, and cut the
    # padded image into nH overlapping row slabs (TH + 2 rows each) so the
    # Pallas grid uses plain blocked indexing for the halo'd input.
    x_nhwc = jnp.transpose(x_nchw, (0, 2, 3, 1))
    xp = jnp.pad(x_nhwc, ((0, 0), (1, 1), (1, 1), (0, 0)))
    slabs = jnp.stack([xp[:, i * TH:i * TH + TH + 2] for i in range(nH)], axis=1)
    # slabs: (N, nH, TH+2, W+2, Cin)

    # Weights: OIHW -> (kh, kw, cin, cout) -> (9*Cin, Cout); matmul dtype = x dtype.
    w_mat = jnp.transpose(w_oihw, (2, 3, 1, 0)).reshape(9 * Cin, Cout).astype(dtype)
    b2 = b.reshape(1, Cout).astype(jnp.float32)

    kernel = functools.partial(_down_kernel, TH=TH, W=W, Cin=Cin, Cout=Cout)

    # VMEM budget: double-buffered blocks + in-kernel im2col / f32 accumulator.
    per_tile = (2 * ((TH + 2) * (W + 2) * Cin * itemsize           # input slab
                     + TH * W * Cout * itemsize                    # conv tile
                     + (TH // 2) * (W // 2) * Cout * itemsize)     # pool tile
                + 2 * 9 * Cin * Cout * itemsize                    # weights
                + TH * W * 9 * Cin * max(itemsize, 4)              # im2col patch
                + TH * W * Cout * 4)                               # f32 acc
    vmem_limit = int(min(48 * 2 ** 20, max(16 * 2 ** 20, 4 * per_tile)))

    conv_out, pool_out = pl.pallas_call(
        kernel,
        out_shape=(
            jax.ShapeDtypeStruct((N, H, W, Cout), dtype),
            jax.ShapeDtypeStruct((N, H // 2, W // 2, Cout), dtype),
        ),
        grid_spec=pltpu.PrefetchScalarGridSpec(
            num_scalar_prefetch=0,
            grid=(N, nH),
            in_specs=[
                pl.BlockSpec((1, 1, TH + 2, W + 2, Cin), lambda n, h: (n, h, 0, 0, 0)),
                pl.BlockSpec((9 * Cin, Cout), lambda n, h: (0, 0)),
                pl.BlockSpec((1, Cout), lambda n, h: (0, 0)),
            ],
            out_specs=[
                pl.BlockSpec((1, TH, W, Cout), lambda n, h: (n, h, 0, 0)),
                pl.BlockSpec((1, TH // 2, W // 2, Cout), lambda n, h: (n, h, 0, 0)),
            ],
        ),
        compiler_params=pltpu.CompilerParams(
            dimension_semantics=("parallel", "parallel"),
            vmem_limit_bytes=vmem_limit,
        ),
    )(slabs, w_mat, b2)

    # Back to PyTorch's NCHW convention.
    conv_nchw = jnp.transpose(conv_out, (0, 3, 1, 2))
    pool_nchw = jnp.transpose(pool_out, (0, 3, 1, 2))
    return pool_nchw, conv_nchw, conv_nchw.shape[2]


def _reference(x_nchw, w_oihw, b):
    conv = jax.lax.conv_general_dilated(
        x_nchw, w_oihw, window_strides=(1, 1), padding="SAME",
        dimension_numbers=("NCHW", "OIHW", "NCHW"),
    ) + b.reshape(1, -1, 1, 1)
    conv = jnp.maximum(conv, 0.0)
    pooled = jax.lax.reduce_window(
        conv, -jnp.inf, jax.lax.max,
        window_dimensions=(1, 1, 2, 2), window_strides=(1, 1, 2, 2),
        padding="VALID",
    )
    return pooled, conv


if __name__ == "__main__":
    key = jax.random.PRNGKey(0)
    kx, kw, kb = jax.random.split(key, 3)

    N, Cin, Cout, H, W = 2, 4, 8, 16, 16
    x = jax.random.normal(kx, (N, Cin, H, W), dtype=jnp.float32)
    w = jax.random.normal(kw, (Cout, Cin, 3, 3), dtype=jnp.float32) * 0.1
    b = jax.random.normal(kb, (Cout,), dtype=jnp.float32) * 0.1

    pooled, conv, h_dim = down_forward(x, w, b, row_tile=8)
    jax.block_until_ready((pooled, conv))

    pooled_want, conv_want = _reference(x, w, b)
    np.testing.assert_allclose(np.asarray(conv), np.asarray(conv_want),
                               rtol=1e-4, atol=1e-4)
    np.testing.assert_allclose(np.asarray(pooled), np.asarray(pooled_want),
                               rtol=1e-4, atol=1e-4)
    assert h_dim == H
    assert pooled.shape == (N, Cout, H // 2, W // 2)
    assert conv.shape == (N, Cout, H, W)

    # Second spatial tiling (more halo crossings) to validate the row tiles.
    pooled2, conv2, _ = down_forward(x, w, b, row_tile=4)
    jax.block_until_ready((pooled2, conv2))
    np.testing.assert_allclose(np.asarray(conv2), np.asarray(conv_want),
                               rtol=1e-4, atol=1e-4)
    np.testing.assert_allclose(np.asarray(pooled2), np.asarray(pooled_want),
                               rtol=1e-4, atol=1e-4)

    print("KERNEL_OK")
</pallas_src>

<mosaic_0001>
module attributes {stable_mosaic.version = 11 : i64} {
  func.func @_down_kernel(%arg0: i32, %arg1: i32, %arg2: memref<1x1x10x18x4xf32, #tpu.memory_space<vmem>>, %arg3: memref<36x8xf32, #tpu.memory_space<vmem>>, %arg4: memref<1x8xf32, #tpu.memory_space<vmem>>, %arg5: memref<1x8x16x8xf32, #tpu.memory_space<vmem>>, %arg6: memref<1x4x8x8xf32, #tpu.memory_space<vmem>>) attributes {dimension_semantics = [#tpu.dimension_semantics<parallel>, #tpu.dimension_semantics<parallel>], iteration_bounds = array<i64: 2, 2>, scalar_prefetch = 0 : i64, scratch_operands = 0 : i64, tpu.core_type = #tpu.core_type<tc>, window_params = [{transform_indices = @transform_0, window_bounds = array<i64: 1, 1, 10, 18, 4>}, {pipeline_mode = #tpu.pipeline_mode<synchronous>, transform_indices = @transform_1, window_bounds = array<i64: 36, 8>}, {pipeline_mode = #tpu.pipeline_mode<synchronous>, transform_indices = @transform_2, window_bounds = array<i64: 1, 8>}, {transform_indices = @transform_3, window_bounds = array<i64: 1, 8, 16, 8>}, {transform_indices = @transform_4, window_bounds = array<i64: 1, 4, 8, 8>}]} {
    %c0 = arith.constant 0 : index
    %c0_0 = arith.constant 0 : index
    %c0_1 = arith.constant 0 : index
    %c0_2 = arith.constant 0 : index
    %c0_3 = arith.constant 0 : index
    %0 = vector.load %arg2[%c0, %c0_0, %c0_1, %c0_2, %c0_3] : memref<1x1x10x18x4xf32, #tpu.memory_space<vmem>>, vector<1x1x8x16x4xf32>
    %1 = vector.shape_cast %0 : vector<1x1x8x16x4xf32> to vector<8x16x4xf32>
    %c0_4 = arith.constant 0 : index
    %c0_5 = arith.constant 0 : index
    %c0_6 = arith.constant 0 : index
    %c1 = arith.constant 1 : index
    %c0_7 = arith.constant 0 : index
    %2 = vector.load %arg2[%c0_4, %c0_5, %c0_6, %c1, %c0_7] : memref<1x1x10x18x4xf32, #tpu.memory_space<vmem>>, vector<1x1x8x16x4xf32>
    %3 = vector.shape_cast %2 : vector<1x1x8x16x4xf32> to vector<8x16x4xf32>
    %c0_8 = arith.constant 0 : index
    %c0_9 = arith.constant 0 : index
    %c0_10 = arith.constant 0 : index
    %c2 = arith.constant 2 : index
    %c0_11 = arith.constant 0 : index
    %4 = vector.load %arg2[%c0_8, %c0_9, %c0_10, %c2, %c0_11] : memref<1x1x10x18x4xf32, #tpu.memory_space<vmem>>, vector<1x1x8x16x4xf32>
    %5 = vector.shape_cast %4 : vector<1x1x8x16x4xf32> to vector<8x16x4xf32>
    %c0_12 = arith.constant 0 : index
    %c0_13 = arith.constant 0 : index
    %c1_14 = arith.constant 1 : index
    %c0_15 = arith.constant 0 : index
    %c0_16 = arith.constant 0 : index
    %6 = vector.load %arg2[%c0_12, %c0_13, %c1_14, %c0_15, %c0_16] : memref<1x1x10x18x4xf32, #tpu.memory_space<vmem>>, vector<1x1x8x16x4xf32>
    %7 = vector.shape_cast %6 : vector<1x1x8x16x4xf32> to vector<8x16x4xf32>
    %c0_17 = arith.constant 0 : index
    %c0_18 = arith.constant 0 : index
    %c1_19 = arith.constant 1 : index
    %c1_20 = arith.constant 1 : index
    %c0_21 = arith.constant 0 : index
    %8 = vector.load %arg2[%c0_17, %c0_18, %c1_19, %c1_20, %c0_21] : memref<1x1x10x18x4xf32, #tpu.memory_space<vmem>>, vector<1x1x8x16x4xf32>
    %9 = vector.shape_cast %8 : vector<1x1x8x16x4xf32> to vector<8x16x4xf32>
    %c0_22 = arith.constant 0 : index
    %c0_23 = arith.constant 0 : index
    %c1_24 = arith.constant 1 : index
    %c2_25 = arith.constant 2 : index
    %c0_26 = arith.constant 0 : index
    %10 = vector.load %arg2[%c0_22, %c0_23, %c1_24, %c2_25, %c0_26] : memref<1x1x10x18x4xf32, #tpu.memory_space<vmem>>, vector<1x1x8x16x4xf32>
    %11 = vector.shape_cast %10 : vector<1x1x8x16x4xf32> to vector<8x16x4xf32>
    %c0_27 = arith.constant 0 : index
    %c0_28 = arith.constant 0 : index
    %c2_29 = arith.constant 2 : index
    %c0_30 = arith.constant 0 : index
    %c0_31 = arith.constant 0 : index
    %12 = vector.load %arg2[%c0_27, %c0_28, %c2_29, %c0_30, %c0_31] : memref<1x1x10x18x4xf32, #tpu.memory_space<vmem>>, vector<1x1x8x16x4xf32>
    %13 = vector.shape_cast %12 : vector<1x1x8x16x4xf32> to vector<8x16x4xf32>
    %c0_32 = arith.constant 0 : index
    %c0_33 = arith.constant 0 : index
    %c2_34 = arith.constant 2 : index
    %c1_35 = arith.constant 1 : index
    %c0_36 = arith.constant 0 : index
    %14 = vector.load %arg2[%c0_32, %c0_33, %c2_34, %c1_35, %c0_36] : memref<1x1x10x18x4xf32, #tpu.memory_space<vmem>>, vector<1x1x8x16x4xf32>
    %15 = vector.shape_cast %14 : vector<1x1x8x16x4xf32> to vector<8x16x4xf32>
    %c0_37 = arith.constant 0 : index
    %c0_38 = arith.constant 0 : index
    %c2_39 = arith.constant 2 : index
    %c2_40 = arith.constant 2 : index
    %c0_41 = arith.constant 0 : index
    %16 = vector.load %arg2[%c0_37, %c0_38, %c2_39, %c2_40, %c0_41] : memref<1x1x10x18x4xf32, #tpu.memory_space<vmem>>, vector<1x1x8x16x4xf32>
    %17 = vector.shape_cast %16 : vector<1x1x8x16x4xf32> to vector<8x16x4xf32>
    %18 = tpu.concatenate %1, %3, %5, %7, %9, %11, %13, %15, %17 in 2 : vector<8x16x4xf32>, vector<8x16x4xf32>, vector<8x16x4xf32>, vector<8x16x4xf32>, vector<8x16x4xf32>, vector<8x16x4xf32>, vector<8x16x4xf32>, vector<8x16x4xf32>, vector<8x16x4xf32> -> vector<8x16x36xf32>
    %19 = vector.shape_cast %18 : vector<8x16x36xf32> to vector<128x36xf32>
    %c0_42 = arith.constant 0 : index
    %c0_43 = arith.constant 0 : index
    %20 = vector.load %arg3[%c0_42, %c0_43] : memref<36x8xf32, #tpu.memory_space<vmem>>, vector<36x8xf32>
    %cst = arith.constant dense<0.000000e+00> : vector<128x8xf32>
    %21 = tpu.matmul %19, %20, %cst {dimension_numbers = #tpu.dot_dimension_numbers<[1], [0], [0], [1], [0, 0, 1, 1], [], []>} : vector<128x36xf32>, vector<36x8xf32>, vector<128x8xf32> -> vector<128x8xf32>
    %c0_44 = arith.constant 0 : index
    %c0_45 = arith.constant 0 : index
    %22 = vector.load %arg4[%c0_44, %c0_45] : memref<1x8xf32, #tpu.memory_space<vmem>>, vector<1x8xf32>
    %23 = vector.broadcast %22 : vector<1x8xf32> to vector<128x8xf32>
    %24 = arith.addf %21, %23 : vector<128x8xf32>
    %cst_46 = arith.constant 0.000000e+00 : f32
    %25 = vector.broadcast %cst_46 : f32 to vector<128x8xf32>
    %26 = arith.maximumf %24, %25 : vector<128x8xf32>
    %27 = vector.shape_cast %26 : vector<128x8xf32> to vector<8x16x8xf32>
    %c0_47 = arith.constant 0 : index
    %c0_48 = arith.constant 0 : index
    %c0_49 = arith.constant 0 : index
    %c0_50 = arith.constant 0 : index
    %28 = vector.load %arg5[%c0_47, %c0_48, %c0_49, %c0_50] : memref<1x8x16x8xf32, #tpu.memory_space<vmem>>, vector<1x8x16x8xf32>
    %29 = vector.shape_cast %28 : vector<1x8x16x8xf32> to vector<8x16x8xf32>
    %30 = vector.shape_cast %27 : vector<8x16x8xf32> to vector<1x8x16x8xf32>
    tpu.vector_store %arg5[%c0_47, %c0_48, %c0_49, %c0_50], %30 {strides = array<i32>} : memref<1x8x16x8xf32, #tpu.memory_space<vmem>>, vector<1x8x16x8xf32>,
    %31 = vector.shape_cast %27 : vector<8x16x8xf32> to vector<4x2x16x8xf32>
    %32 = vector.extract_strided_slice %31 {offsets = [0, 0, 0, 0], sizes = [4, 1, 16, 8], strides = [1, 1, 1, 1]} : vector<4x2x16x8xf32> to vector<4x1x16x8xf32>
    %33 = vector.shape_cast %32 : vector<4x1x16x8xf32> to vector<4x16x8xf32>
    %34 = vector.extract_strided_slice %31 {offsets = [0, 1, 0, 0], sizes = [4, 1, 16, 8], strides = [1, 1, 1, 1]} : vector<4x2x16x8xf32> to vector<4x1x16x8xf32>
    %35 = vector.shape_cast %34 : vector<4x1x16x8xf32> to vector<4x16x8xf32>
    %36 = arith.maximumf %33, %35 : vector<4x16x8xf32>
    %37 = vector.shape_cast %36 : vector<4x16x8xf32> to vector<4x8x2x8xf32>
    %38 = vector.extract_strided_slice %37 {offsets = [0, 0, 0, 0], sizes = [4, 8, 1, 8], strides = [1, 1, 1, 1]} : vector<4x8x2x8xf32> to vector<4x8x1x8xf32>
    %39 = vector.shape_cast %38 : vector<4x8x1x8xf32> to vector<4x8x8xf32>
    %40 = vector.extract_strided_slice %37 {offsets = [0, 0, 1, 0], sizes = [4, 8, 1, 8], strides = [1, 1, 1, 1]} : vector<4x8x2x8xf32> to vector<4x8x1x8xf32>
    %41 = vector.shape_cast %40 : vector<4x8x1x8xf32> to vector<4x8x8xf32>
    %42 = arith.maximumf %39, %41 : vector<4x8x8xf32>
    %c0_51 = arith.constant 0 : index
    %c0_52 = arith.constant 0 : index
    %c0_53 = arith.constant 0 : index
    %c0_54 = arith.constant 0 : index
    %43 = vector.load %arg6[%c0_51, %c0_52, %c0_53, %c0_54] : memref<1x4x8x8xf32, #tpu.memory_space<vmem>>, vector<1x4x8x8xf32>
    %44 = vector.shape_cast %43 : vector<1x4x8x8xf32> to vector<4x8x8xf32>
    %45 = vector.shape_cast %42 : vector<4x8x8xf32> to vector<1x4x8x8xf32>
    tpu.vector_store %arg6[%c0_51, %c0_52, %c0_53, %c0_54], %45 {strides = array<i32>} : memref<1x4x8x8xf32, #tpu.memory_space<vmem>>, vector<1x4x8x8xf32>,
    return
  }
  func.func @transform_0(%arg0: i32, %arg1: i32) -> (i32, i32, i32, i32, i32) {
    %c0_i32 = arith.constant 0 : i32
    %c0_i32_0 = arith.constant 0 : i32
    %c0_i32_1 = arith.constant 0 : i32
    %c0_i32_2 = arith.constant 0 : i32
    return %arg0, %arg1, %c0_i32, %c0_i32_0, %c0_i32_1 : i32, i32, i32, i32, i32
  }
  func.func @transform_1(%arg0: i32, %arg1: i32) -> (i32, i32) {
    %c0_i32 = arith.constant 0 : i32
    %c0_i32_0 = arith.constant 0 : i32
    %c0_i32_1 = arith.constant 0 : i32
    return %c0_i32, %c0_i32_0 : i32, i32
  }
  func.func @transform_2(%arg0: i32, %arg1: i32) -> (i32, i32) {
    %c0_i32 = arith.constant 0 : i32
    %c0_i32_0 = arith.constant 0 : i32
    %c0_i32_1 = arith.constant 0 : i32
    return %c0_i32, %c0_i32_0 : i32, i32
  }
  func.func @transform_3(%arg0: i32, %arg1: i32) -> (i32, i32, i32, i32) {
    %c0_i32 = arith.constant 0 : i32
    %c0_i32_0 = arith.constant 0 : i32
    %c0_i32_1 = arith.constant 0 : i32
    return %arg0, %arg1, %c0_i32, %c0_i32_0 : i32, i32, i32, i32
  }
  func.func @transform_4(%arg0: i32, %arg1: i32) -> (i32, i32, i32, i32) {
    %c0_i32 = arith.constant 0 : i32
    %c0_i32_0 = arith.constant 0 : i32
    %c0_i32_1 = arith.constant 0 : i32
    return %arg0, %arg1, %c0_i32, %c0_i32_0 : i32, i32, i32, i32
  }
}

</mosaic_0001>

<llo_original>
// kernel: tpu_custom_call.1
$region0: #{tpu_custom_call.1}
  #allocation0 [shape = 'u32[]', space=smem, size = 0x4, offset = 0x4, fixed_abs, tag = 'smem constant byte address 0x4 - core index']
  #allocation1 [shape = 'u32[144,128]{1,0:T(1,128)}', space=vmem, size = 0x12000, scoped, tag = 'internal scratch']
  %s0 = inlined_call_operand.vmem [shape: f32[2,2,10,18,4], index: 0, kind: input, shape index: {}]
  %s1 = inlined_call_operand.vmem [shape: f32[36,8], index: 1, kind: input, shape index: {}]
  %s2 = inlined_call_operand.vmem [shape: f32[1,8], index: 2, kind: input, shape index: {}]
  %s3 = inlined_call_operand.vmem [shape: f32[2,16,16,8], index: 3, kind: output, shape index: {0}]
  %s4 = inlined_call_operand.hbm [shape: f32[2,8,8,8], index: 4, kind: output, shape index: {1}]
  %5 = xla_tuple %s3, %s4
  %s6 = sld [smem:[#allocation0]]
  $region53: #{tpu_custom_call.1} parent=0
    _
  %s8 = ssub.s32 1, %s6
  %s9 = scalar_select 0, %s8, %s6
  $region1: #{tpu_custom_call.1} parent=0
    #allocation2 [shape = 'u8[32768]{0}', space=vmem, size = 0x8000, scoped, tag = 'output window, operand 1']
    #allocation3 [shape = 's32[2]{0}', space=sflag, size = 0x8, scoped, tag = 'scoped memory for tpu_custom_call.1']
    %10 = vsyncpa [#allocation3], 0
    %s11 = scalar_lea.sflag [#allocation3], 1
    %12 = vsyncpa %s11, 0
    loop: start=0, step=1, limit=6
    $region2: #{tpu_custom_call.1} parent=1 // loop_pre_header
      _
    $region3: #{tpu_custom_call.1} parent=1 // loop_header
      %s14 = sphi 0, %s18
      %p15 = scmp.ge.s32.totalorder %s14, 6
      %s21 = sphi 0, %s33
      %s22 = sphi 0, %s29
      %s23 = sphi 0, %s21
      %s24 = sphi 0, %s22
      %s25 = sphi 0, %s23
      %s26 = sphi 0, %s24
      %s38 = sphi 0, %s40
      %s41 = sphi 0, %s38
      %s42 = sphi 0, %s41
      %s58 = sphi 0, %s42
      %s62 = sphi 0, %s62
      %s64 = sphi 0, %s62
      %s65 = sphi 0, %s64
      %s79 = sphi 0, %s65
      %s83 = sphi 0, %s83
      %s85 = sphi 0, %s83
      %s86 = sphi 0, %s85
      %s100 = sphi 0, %s86
      %s108 = sphi 0, %s110
      %s111 = sphi 0, %s108
      %s112 = sphi 0, %s111
      %s128 = sphi 0, %s112
      %s136 = sphi 0, %s138
      %s139 = sphi 0, %s136
      %s140 = sphi 0, %s139
      %s156 = sphi 0, %s140
    $region4: #{tpu_custom_call.1} parent=1 // loop_header_branch
      %17 = sbr.rel (%p15) target = $region8
    $region5: #{tpu_custom_call.1} parent=1 // loop_body
      %s19 = ssub.s32 %s14, 1
      %s20 = ssub.s32 %s14, 2
      %s27 = sadd.s32 1, %s22
      %p28 = scmp.ge.s32.totalorder %s27, 2
      %s29 = scalar_select %p28, 0, %s27
      %s30 = sadd.s32 1, %s21
      %s31 = scalar_select %p28, %s30, %s21
      %p32 = scmp.ge.s32.totalorder %s31, 2
      %s33 = scalar_select %p32, 0, %s31
      %s34 = ssub.s32 %s21, %s33
      %s35 = ssub.s32 %s22, %s29
      %s36 = sor.u32 %s34, %s35
      %p37 = scmp.eq.s32.totalorder %s36, 0
      %s39 = sadd.s32 %s38, 1
      %s40 = scalar_select %p37, %s38, %s39
      %p43 = pneg %p37
      %p44 = scmp.eq.s32.totalorder %s14, 3
      %p45 = por %p43, %p44
      %p46 = scmp.ne.s32.totalorder %s38, %s41
      %p47 = scmp.eq.s32.totalorder %s14, 0
      %p48 = por %p46, %p47
      %p49 = scmp.ne.s32.totalorder %s38, %s41
      %p50 = scmp.eq.s32.totalorder %s19, 3
      %p51 = por %p49, %p50
      %p52 = scmp.ne.s32.totalorder %s41, %s42
      %p53 = scmp.eq.s32.totalorder %s19, 0
      %p54 = por %p52, %p53
      %p55 = scmp.ne.s32.totalorder %s41, %s42
      %p56 = scmp.eq.s32.totalorder %s20, 3
      %p57 = por %p55, %p56
      %p59 = scmp.ne.s32.totalorder %s42, %s58
      %p60 = scmp.eq.s32.totalorder %s20, 0
      %p61 = por %p59, %p60
      %s63 = sadd.s32 %s62, 1
      %p66 = scmp.eq.s32.totalorder %s14, 3
      %p67 = scmp.ne.s32.totalorder %s62, %s64
      %p68 = scmp.eq.s32.totalorder %s14, 0
      %p69 = por %p67, %p68
      %p70 = scmp.ne.s32.totalorder %s62, %s64
      %p71 = scmp.eq.s32.totalorder %s19, 3
      %p72 = por %p70, %p71
      %p73 = scmp.ne.s32.totalorder %s64, %s65
      %p74 = scmp.eq.s32.totalorder %s19, 0
      %p75 = por %p73, %p74
      %p76 = scmp.ne.s32.totalorder %s64, %s65
      %p77 = scmp.eq.s32.totalorder %s20, 3
      %p78 = por %p76, %p77
      %p80 = scmp.ne.s32.totalorder %s65, %s79
      %p81 = scmp.eq.s32.totalorder %s20, 0
      %p82 = por %p80, %p81
      %s84 = sadd.s32 %s83, 1
      %p87 = scmp.eq.s32.totalorder %s14, 3
      %p88 = scmp.ne.s32.totalorder %s83, %s85
      %p89 = scmp.eq.s32.totalorder %s14, 0
      %p90 = por %p88, %p89
      %p91 = scmp.ne.s32.totalorder %s83, %s85
      %p92 = scmp.eq.s32.totalorder %s19, 3
      %p93 = por %p91, %p92
      %p94 = scmp.ne.s32.totalorder %s85, %s86
      %p95 = scmp.eq.s32.totalorder %s19, 0
      %p96 = por %p94, %p95
      %p97 = scmp.ne.s32.totalorder %s85, %s86
      %p98 = scmp.eq.s32.totalorder %s20, 3
      %p99 = por %p97, %p98
      %p101 = scmp.ne.s32.totalorder %s86, %s100
      %p102 = scmp.eq.s32.totalorder %s20, 0
      %p103 = por %p101, %p102
      %s104 = ssub.s32 %s21, %s33
      %s105 = ssub.s32 %s22, %s29
      %s106 = sor.u32 %s104, %s105
      %p107 = scmp.eq.s32.totalorder %s106, 0
      %s109 = sadd.s32 %s108, 1
      %s110 = scalar_select %p107, %s108, %s109
      %p113 = pneg %p107
      %p114 = scmp.eq.s32.totalorder %s14, 3
      %p115 = por %p113, %p114
      %p116 = scmp.ne.s32.totalorder %s108, %s111
      %p117 = scmp.eq.s32.totalorder %s14, 0
      %p118 = por %p116, %p117
      %p119 = scmp.ne.s32.totalorder %s108, %s111
      %p120 = scmp.eq.s32.totalorder %s19, 3
      %p121 = por %p119, %p120
      %p122 = scmp.ne.s32.totalorder %s111, %s112
      %p123 = scmp.eq.s32.totalorder %s19, 0
      %p124 = por %p122, %p123
      %p125 = scmp.ne.s32.totalorder %s111, %s112
      %p126 = scmp.eq.s32.totalorder %s20, 3
      %p127 = por %p125, %p126
      %p129 = scmp.ne.s32.totalorder %s112, %s128
      %p130 = scmp.eq.s32.totalorder %s20, 0
      %p131 = por %p129, %p130
      %s132 = ssub.s32 %s21, %s33
      %s133 = ssub.s32 %s22, %s29
      %s134 = sor.u32 %s132, %s133
      %p135 = scmp.eq.s32.totalorder %s134, 0
      %s137 = sadd.s32 %s136, 1
      %s138 = scalar_select %p135, %s136, %s137
      %p141 = pneg %p135
      %p142 = scmp.eq.s32.totalorder %s14, 3
      %p143 = por %p141, %p142
      %p144 = scmp.ne.s32.totalorder %s136, %s139
      %p145 = scmp.eq.s32.totalorder %s14, 0
      %p146 = por %p144, %p145
      %p147 = scmp.ne.s32.totalorder %s136, %s139
      %p148 = scmp.eq.s32.totalorder %s19, 3
      %p149 = por %p147, %p148
      %p150 = scmp.ne.s32.totalorder %s139, %s140
      %p151 = scmp.eq.s32.totalorder %s19, 0
      %p152 = por %p150, %p151
      %p153 = scmp.ne.s32.totalorder %s139, %s140
      %p154 = scmp.eq.s32.totalorder %s20, 3
      %p155 = por %p153, %p154
      %p157 = scmp.ne.s32.totalorder %s140, %s156
      %p158 = scmp.eq.s32.totalorder %s20, 0
      %p159 = por %p157, %p158
      %p160 = scmp.le.s32.totalorder 1, %s14
      %p161 = scmp.lt.s32.totalorder %s14, 5
      %p162 = pnand %p160, %p161
      %p163 = pneg %p162
      // Predicated region
      $region9: #{tpu_custom_call.1} parent=5 // pred_check
        _
      $region10: #{tpu_custom_call.1} parent=5 // pred_check_branch
        %165 = sbr.rel (%p162) target = $region12
      $region11: #{tpu_custom_call.1} parent=5 // pred_region
        %s166 = ssub.s32 %s14, 1
        // Predicated region
        $region13: #{tpu_custom_call.1} parent=11 // pred_check
          %p167 = pneg %p75
        $region14: #{tpu_custom_call.1} parent=11 // pred_check_branch
          %169 = sbr.rel (%p167) target = $region16
        $region15: #{tpu_custom_call.1} parent=11 // pred_region
          _
        $region16: #{tpu_custom_call.1} parent=11 // pred_fallthru
          _
        // Predicated region
        $region17: #{tpu_custom_call.1} parent=11 // pred_check
          %p170 = pneg %p96
        $region18: #{tpu_custom_call.1} parent=11 // pred_check_branch
          %172 = sbr.rel (%p170) target = $region20
        $region19: #{tpu_custom_call.1} parent=11 // pred_region
          _
        $region20: #{tpu_custom_call.1} parent=11 // pred_fallthru
          _
      $region12: #{tpu_custom_call.1} parent=5 // pred_fallthru
        _
      %p173 = scmp.lt.s32.totalorder %s14, 4
      // Predicated region
      $region21: #{tpu_custom_call.1} parent=5 // pred_check
        %p174 = pneg %p173
      $region22: #{tpu_custom_call.1} parent=5 // pred_check_branch
        %176 = sbr.rel (%p174) target = $region24
      $region23: #{tpu_custom_call.1} parent=5 // pred_region
        // Predicated region
        $region25: #{tpu_custom_call.1} parent=23 // pred_check
          %p177 = pneg %p48
        $region26: #{tpu_custom_call.1} parent=23 // pred_check_branch
          %179 = sbr.rel (%p177) target = $region28
        $region27: #{tpu_custom_call.1} parent=23 // pred_region
          %p180 = scmp.lt.s32.totalorder %s21, 1
          %s181 = scalar_select %p180, %s21, 1
          %p182 = scmp.lt.s32.totalorder %s22, 1
          %s183 = scalar_select %p182, %s22, 1
          %s184 = smul.addr %s183, 30
          %s185 = smul.addr %s181, 60
          %s186 = sadd.s32 %s184, %s185
          %s187 = smul.addr %s186, 8
          %s188 = scalar_lea.vmem %s0, %s187
        $region28: #{tpu_custom_call.1} parent=23 // pred_fallthru
          _
      $region24: #{tpu_custom_call.1} parent=5 // pred_fallthru
        _
      %p189 = scmp.le.s32.totalorder 1, %s14
      %p190 = scmp.lt.s32.totalorder %s14, 5
      %p191 = pnand %p189, %p190
      %p192 = pneg %p191
      // Predicated region
      $region29: #{tpu_custom_call.1} parent=5 // pred_check
        _
      $region30: #{tpu_custom_call.1} parent=5 // pred_check_branch
        %194 = sbr.rel (%p191) target = $region32
      $region31: #{tpu_custom_call.1} parent=5 // pred_region
        %s195 = ssub.s32 %s14, 1
        %p196 = scmp.lt.s32.totalorder %s23, 1
        %s197 = scalar_select %p196, %s23, 1
        %p198 = scmp.lt.s32.totalorder %s24, 1
        %s199 = scalar_select %p198, %s24, 1
        %s200 = smul.addr %s199, 30
        %s201 = smul.addr %s197, 60
        %s202 = sadd.s32 %s200, %s201
        %s203 = smul.addr %s202, 8
        %s204 = scalar_lea.vmem %s0, %s203
        %p205 = pneg %p54
        %p206 = pneg %p51
        %p207 = pneg %p75
        %p208 = pneg %p72
        %p209 = pneg %p96
        %p210 = pneg %p93
        %p211 = pneg %p124
        %p212 = pneg %p121
        %s213 = smul.u32 8, %s24
        %p214 = scmp.lt.s32.totalorder %s23, 1
        %s215 = scalar_select %p214, %s23, 1
        %p216 = scmp.lt.s32.totalorder %s213, 15
        %s217 = scalar_select %p216, %s213, 15
        %s218 = smul.addr %s217, 2
        %s219 = smul.addr %s215, 32
        %s220 = sadd.s32 %s218, %s219
        %s221 = smul.addr %s220, 8
        %s222 = scalar_lea.vmem %s3, %s221
        %p223 = pneg %p152
        %p224 = pneg %p149
        %s225 = sand.u32 %s139, 1
        %s226 = scalar_lea.sflag [#allocation3], %s225
        %s227 = sand.u32 %s139, 1
        %s228 = smul.addr %s227, 32
        %s229 = scalar_lea.vmem [#allocation2], %s228
        %p230 = scmp.lt.s32.totalorder %s23, 1
        %s231 = scalar_select %p230, %s23, 1
        %p232 = scmp.lt.s32.totalorder %s24, 1
        %s233 = scalar_select %p232, %s24, 1
        %s234 = smul.addr %s233, 30
        %s235 = smul.addr %s231, 60
        %s236 = sadd.s32 %s234, %s235
        %s237 = smul.addr %s236, 8
        %s238 = scalar_lea.vmem %s0, %s237
        %s239 = smul.u32 8, %s24
        %p240 = scmp.lt.s32.totalorder %s23, 1
        %s241 = scalar_select %p240, %s23, 1
        %p242 = scmp.lt.s32.totalorder %s239, 15
        %s243 = scalar_select %p242, %s239, 15
        %s244 = smul.addr %s243, 2
        %s245 = smul.addr %s241, 32
        %s246 = sadd.s32 %s244, %s245
        %s247 = smul.addr %s246, 8
        %s248 = scalar_lea.vmem %s3, %s247
        %s249 = smul.u32 8, %s24
        %s250 = smul.u32 4, %s24
        %v251 = vld [vmem:[%s238] sm:$0xff]
        %v252 = vld [vmem:[%s238 + $0x8] sm:$0xff]
        %v253 = vld [vmem:[%s238 + $0x18] sm:$0xff]
        %v254 = vld [vmem:[%s238 + $0x20] sm:$0xff]
        %v255 = vld [vmem:[%s238 + $0x30] sm:$0xff]
        %v256 = vld [vmem:[%s238 + $0x38] sm:$0xff]
        %v257 = vld [vmem:[%s238 + $0x48] sm:$0xff]
        %v258 = vld [vmem:[%s238 + $0x50] sm:$0xff]
        %v259 = vld [vmem:[%s238 + $0x60] sm:$0xff]
        %v260 = vld [vmem:[%s238 + $0x68] sm:$0xff]
        %v261 = vld [vmem:[%s238 + $0x78] sm:$0xff]
        %v262 = vld [vmem:[%s238 + $0x80] sm:$0xff]
        %v263 = vld [vmem:[%s238 + $0x90] sm:$0xff]
        %v264 = vld [vmem:[%s238 + $0x98] sm:$0xff]
        %v265 = vld [vmem:[%s238 + $0xa8] sm:$0xff]
        %v266 = vld [vmem:[%s238 + $0xb0] sm:$0xff]
        %v267 = vld [vmem:[%s238 + $0x1] sm:$0xff]
        %v268 = vld [vmem:[%s238 + $0x9] sm:$0xff]
        %v269 = vld [vmem:[%s238 + $0x19] sm:$0xff]
        %v270 = vld [vmem:[%s238 + $0x21] sm:$0xff]
        %v271 = vld [vmem:[%s238 + $0x31] sm:$0xff]
        %v272 = vld [vmem:[%s238 + $0x39] sm:$0xff]
        %v273 = vld [vmem:[%s238 + $0x49] sm:$0xff]
        %v274 = vld [vmem:[%s238 + $0x51] sm:$0xff]
        %v275 = vld [vmem:[%s238 + $0x61] sm:$0xff]
        %v276 = vld [vmem:[%s238 + $0x69] sm:$0xff]
        %v277 = vld [vmem:[%s238 + $0x79] sm:$0xff]
        %v278 = vld [vmem:[%s238 + $0x81] sm:$0xff]
        %v279 = vld [vmem:[%s238 + $0x91] sm:$0xff]
        %v280 = vld [vmem:[%s238 + $0x99] sm:$0xff]
        %v281 = vld [vmem:[%s238 + $0xa9] sm:$0xff]
        %v282 = vld [vmem:[%s238 + $0xb1] sm:$0xff]
        %v283 = vld [vmem:[%s238 + $0x2] sm:$0xff]
        %v284 = vld [vmem:[%s238 + $0xa] sm:$0xff]
        %v285 = vld [vmem:[%s238 + $0x1a] sm:$0xff]
        %v286 = vld [vmem:[%s238 + $0x22] sm:$0xff]
        %v287 = vld [vmem:[%s238 + $0x32] sm:$0xff]
        %v288 = vld [vmem:[%s238 + $0x3a] sm:$0xff]
        %v289 = vld [vmem:[%s238 + $0x4a] sm:$0xff]
        %v290 = vld [vmem:[%s238 + $0x52] sm:$0xff]
        %v291 = vld [vmem:[%s238 + $0x62] sm:$0xff]
        %v292 = vld [vmem:[%s238 + $0x6a] sm:$0xff]
        %v293 = vld [vmem:[%s238 + $0x7a] sm:$0xff]
        %v294 = vld [vmem:[%s238 + $0x82] sm:$0xff]
        %v295 = vld [vmem:[%s238 + $0x92] sm:$0xff]
        %v296 = vld [vmem:[%s238 + $0x9a] sm:$0xff]
        %v297 = vld [vmem:[%s238 + $0xaa] sm:$0xff]
        %v298 = vld [vmem:[%s238 + $0xb2] sm:$0xff]
        %s299 = scalar_lea.vmem %s238, 24
        %v300 = vld [vmem:[%s299] sm:$0xff]
        %v301 = vld [vmem:[%s299 + $0x8] sm:$0xff]
        %v302 = vld [vmem:[%s299 + $0x18] sm:$0xff]
        %v303 = vld [vmem:[%s299 + $0x20] sm:$0xff]
        %v304 = vld [vmem:[%s299 + $0x30] sm:$0xff]
        %v305 = vld [vmem:[%s299 + $0x38] sm:$0xff]
        %v306 = vld [vmem:[%s299 + $0x48] sm:$0xff]
        %v307 = vld [vmem:[%s299 + $0x50] sm:$0xff]
        %v308 = vld [vmem:[%s299 + $0x60] sm:$0xff]
        %v309 = vld [vmem:[%s299 + $0x68] sm:$0xff]
        %v310 = vld [vmem:[%s299 + $0x78] sm:$0xff]
        %v311 = vld [vmem:[%s299 + $0x80] sm:$0xff]
        %v312 = vld [vmem:[%s299 + $0x90] sm:$0xff]
        %v313 = vld [vmem:[%s299 + $0x98] sm:$0xff]
        %v314 = vld [vmem:[%s299 + $0xa8] sm:$0xff]
        %v315 = vld [vmem:[%s299 + $0xb0] sm:$0xff]
        %v316 = vld [vmem:[%s299 + $0x1] sm:$0xff]
        %v317 = vld [vmem:[%s299 + $0x9] sm:$0xff]
        %v318 = vld [vmem:[%s299 + $0x19] sm:$0xff]
        %v319 = vld [vmem:[%s299 + $0x21] sm:$0xff]
        %v320 = vld [vmem:[%s299 + $0x31] sm:$0xff]
        %v321 = vld [vmem:[%s299 + $0x39] sm:$0xff]
        %v322 = vld [vmem:[%s299 + $0x49] sm:$0xff]
        %v323 = vld [vmem:[%s299 + $0x51] sm:$0xff]
        %v324 = vld [vmem:[%s299 + $0x61] sm:$0xff]
        %v325 = vld [vmem:[%s299 + $0x69] sm:$0xff]
        %v326 = vld [vmem:[%s299 + $0x79] sm:$0xff]
        %v327 = vld [vmem:[%s299 + $0x81] sm:$0xff]
        %v328 = vld [vmem:[%s299 + $0x91] sm:$0xff]
        %v329 = vld [vmem:[%s299 + $0x99] sm:$0xff]
        %v330 = vld [vmem:[%s299 + $0xa9] sm:$0xff]
        %v331 = vld [vmem:[%s299 + $0xb1] sm:$0xff]
        %v332 = vld [vmem:[%s299 + $0x2] sm:$0xff]
        %v333 = vld [vmem:[%s299 + $0xa] sm:$0xff]
        %v334 = vld [vmem:[%s299 + $0x1a] sm:$0xff]
        %v335 = vld [vmem:[%s299 + $0x22] sm:$0xff]
        %v336 = vld [vmem:[%s299 + $0x32] sm:$0xff]
        %v337 = vld [vmem:[%s299 + $0x3a] sm:$0xff]
        %v338 = vld [vmem:[%s299 + $0x4a] sm:$0xff]
        %v339 = vld [vmem:[%s299 + $0x52] sm:$0xff]
        %v340 = vld [vmem:[%s299 + $0x62] sm:$0xff]
        %v341 = vld [vmem:[%s299 + $0x6a] sm:$0xff]
        %v342 = vld [vmem:[%s299 + $0x7a] sm:$0xff]
        %v343 = vld [vmem:[%s299 + $0x82] sm:$0xff]
        %v344 = vld [vmem:[%s299 + $0x92] sm:$0xff]
        %v345 = vld [vmem:[%s299 + $0x9a] sm:$0xff]
        %v346 = vld [vmem:[%s299 + $0xaa] sm:$0xff]
        %v347 = vld [vmem:[%s299 + $0xb2] sm:$0xff]
        %s348 = scalar_lea.vmem %s238, 48
        %v349 = vld [vmem:[%s348] sm:$0xff]
        %v350 = vld [vmem:[%s348 + $0x8] sm:$0xff]
        %v351 = vld [vmem:[%s348 + $0x18] sm:$0xff]
        %v352 = vld [vmem:[%s348 + $0x20] sm:$0xff]
        %v353 = vld [vmem:[%s348 + $0x30] sm:$0xff]
        %v354 = vld [vmem:[%s348 + $0x38] sm:$0xff]
        %v355 = vld [vmem:[%s348 + $0x48] sm:$0xff]
        %v356 = vld [vmem:[%s348 + $0x50] sm:$0xff]
        %v357 = vld [vmem:[%s348 + $0x60] sm:$0xff]
        %v358 = vld [vmem:[%s348 + $0x68] sm:$0xff]
        %v359 = vld [vmem:[%s348 + $0x78] sm:$0xff]
        %v360 = vld [vmem:[%s348 + $0x80] sm:$0xff]
        %v361 = vld [vmem:[%s348 + $0x90] sm:$0xff]
        %v362 = vld [vmem:[%s348 + $0x98] sm:$0xff]
        %v363 = vld [vmem:[%s348 + $0xa8] sm:$0xff]
        %v364 = vld [vmem:[%s348 + $0xb0] sm:$0xff]
        %v365 = vld [vmem:[%s348 + $0x1] sm:$0xff]
        %v366 = vld [vmem:[%s348 + $0x9] sm:$0xff]
        %v367 = vld [vmem:[%s348 + $0x19] sm:$0xff]
        %v368 = vld [vmem:[%s348 + $0x21] sm:$0xff]
        %v369 = vld [vmem:[%s348 + $0x31] sm:$0xff]
        %v370 = vld [vmem:[%s348 + $0x39] sm:$0xff]
        %v371 = vld [vmem:[%s348 + $0x49] sm:$0xff]
        %v372 = vld [vmem:[%s348 + $0x51] sm:$0xff]
        %v373 = vld [vmem:[%s348 + $0x61] sm:$0xff]
        %v374 = vld [vmem:[%s348 + $0x69] sm:$0xff]
        %v375 = vld [vmem:[%s348 + $0x79] sm:$0xff]
        %v376 = vld [vmem:[%s348 + $0x81] sm:$0xff]
        %v377 = vld [vmem:[%s348 + $0x91] sm:$0xff]
        %v378 = vld [vmem:[%s348 + $0x99] sm:$0xff]
        %v379 = vld [vmem:[%s348 + $0xa9] sm:$0xff]
        %v380 = vld [vmem:[%s348 + $0xb1] sm:$0xff]
        %v381 = vld [vmem:[%s348 + $0x2] sm:$0xff]
        %v382 = vld [vmem:[%s348 + $0xa] sm:$0xff]
        %v383 = vld [vmem:[%s348 + $0x1a] sm:$0xff]
        %v384 = vld [vmem:[%s348 + $0x22] sm:$0xff]
        %v385 = vld [vmem:[%s348 + $0x32] sm:$0xff]
        %v386 = vld [vmem:[%s348 + $0x3a] sm:$0xff]
        %v387 = vld [vmem:[%s348 + $0x4a] sm:$0xff]
        %v388 = vld [vmem:[%s348 + $0x52] sm:$0xff]
        %v389 = vld [vmem:[%s348 + $0x62] sm:$0xff]
        %v390 = vld [vmem:[%s348 + $0x6a] sm:$0xff]
        %v391 = vld [vmem:[%s348 + $0x7a] sm:$0xff]
        %v392 = vld [vmem:[%s348 + $0x82] sm:$0xff]
        %v393 = vld [vmem:[%s348 + $0x92] sm:$0xff]
        %v394 = vld [vmem:[%s348 + $0x9a] sm:$0xff]
        %v395 = vld [vmem:[%s348 + $0xaa] sm:$0xff]
        %v396 = vld [vmem:[%s348 + $0xb2] sm:$0xff]
        %413 = vrot.lane.b32.xlu0 %v267, 4
        %v414 = vpop.permute.xlu0 %413
        %415 = vrot.lane.b32.xlu0 %v268, 4
        %v416 = vpop.permute.xlu0 %415
        %417 = vrot.lane.b32.xlu0 %v269, 4
        %v418 = vpop.permute.xlu0 %417
        %419 = vrot.lane.b32.xlu0 %v270, 4
        %v420 = vpop.permute.xlu0 %419
        %421 = vrot.lane.b32.xlu0 %v271, 4
        %v422 = vpop.permute.xlu0 %421
        %423 = vrot.lane.b32.xlu0 %v272, 4
        %v424 = vpop.permute.xlu0 %423
        %425 = vrot.lane.b32.xlu0 %v273, 4
        %v426 = vpop.permute.xlu0 %425
        %427 = vrot.lane.b32.xlu0 %v274, 4
        %v428 = vpop.permute.xlu0 %427
        %429 = vrot.lane.b32.xlu0 %v275, 4
        %v430 = vpop.permute.xlu0 %429
        %431 = vrot.lane.b32.xlu0 %v276, 4
        %v432 = vpop.permute.xlu0 %431
        %433 = vrot.lane.b32.xlu0 %v277, 4
        %v434 = vpop.permute.xlu0 %433
        %435 = vrot.lane.b32.xlu0 %v278, 4
        %v436 = vpop.permute.xlu0 %435
        %437 = vrot.lane.b32.xlu0 %v279, 4
        %v438 = vpop.permute.xlu0 %437
        %439 = vrot.lane.b32.xlu0 %v280, 4
        %v440 = vpop.permute.xlu0 %439
        %441 = vrot.lane.b32.xlu0 %v281, 4
        %v442 = vpop.permute.xlu0 %441
        %443 = vrot.lane.b32.xlu0 %v282, 4
        %v444 = vpop.permute.xlu0 %443
        %477 = vrot.lane.b32.xlu0 %v283, 8
        %v478 = vpop.permute.xlu0 %477
        %479 = vrot.lane.b32.xlu0 %v284, 8
        %v480 = vpop.permute.xlu0 %479
        %481 = vrot.lane.b32.xlu0 %v285, 8
        %v482 = vpop.permute.xlu0 %481
        %483 = vrot.lane.b32.xlu0 %v286, 8
        %v484 = vpop.permute.xlu0 %483
        %485 = vrot.lane.b32.xlu0 %v287, 8
        %v486 = vpop.permute.xlu0 %485
        %487 = vrot.lane.b32.xlu0 %v288, 8
        %v488 = vpop.permute.xlu0 %487
        %489 = vrot.lane.b32.xlu0 %v289, 8
        %v490 = vpop.permute.xlu0 %489
        %491 = vrot.lane.b32.xlu0 %v290, 8
        %v492 = vpop.permute.xlu0 %491
        %493 = vrot.lane.b32.xlu0 %v291, 8
        %v494 = vpop.permute.xlu0 %493
        %495 = vrot.lane.b32.xlu0 %v292, 8
        %v496 = vpop.permute.xlu0 %495
        %497 = vrot.lane.b32.xlu0 %v293, 8
        %v498 = vpop.permute.xlu0 %497
        %499 = vrot.lane.b32.xlu0 %v294, 8
        %v500 = vpop.permute.xlu0 %499
        %501 = vrot.lane.b32.xlu0 %v295, 8
        %v502 = vpop.permute.xlu0 %501
        %503 = vrot.lane.b32.xlu0 %v296, 8
        %v504 = vpop.permute.xlu0 %503
        %505 = vrot.lane.b32.xlu0 %v297, 8
        %v506 = vpop.permute.xlu0 %505
        %507 = vrot.lane.b32.xlu0 %v298, 8
        %v508 = vpop.permute.xlu0 %507
        %541 = vrot.lane.b32.xlu0 %v300, 12
        %v542 = vpop.permute.xlu0 %541
        %543 = vrot.lane.b32.xlu0 %v301, 12
        %v544 = vpop.permute.xlu0 %543
        %545 = vrot.lane.b32.xlu0 %v302, 12
        %v546 = vpop.permute.xlu0 %545
        %547 = vrot.lane.b32.xlu0 %v303, 12
        %v548 = vpop.permute.xlu0 %547
        %549 = vrot.lane.b32.xlu0 %v304, 12
        %v550 = vpop.permute.xlu0 %549
        %551 = vrot.lane.b32.xlu0 %v305, 12
        %v552 = vpop.permute.xlu0 %551
        %553 = vrot.lane.b32.xlu0 %v306, 12
        %v554 = vpop.permute.xlu0 %553
        %555 = vrot.lane.b32.xlu0 %v307, 12
        %v556 = vpop.permute.xlu0 %555
        %557 = vrot.lane.b32.xlu0 %v308, 12
        %v558 = vpop.permute.xlu0 %557
        %559 = vrot.lane.b32.xlu0 %v309, 12
        %v560 = vpop.permute.xlu0 %559
        %561 = vrot.lane.b32.xlu0 %v310, 12
        %v562 = vpop.permute.xlu0 %561
        %563 = vrot.lane.b32.xlu0 %v311, 12
        %v564 = vpop.permute.xlu0 %563
        %565 = vrot.lane.b32.xlu0 %v312, 12
        %v566 = vpop.permute.xlu0 %565
        %567 = vrot.lane.b32.xlu0 %v313, 12
        %v568 = vpop.permute.xlu0 %567
        %569 = vrot.lane.b32.xlu0 %v314, 12
        %v570 = vpop.permute.xlu0 %569
        %571 = vrot.lane.b32.xlu0 %v315, 12
        %v572 = vpop.permute.xlu0 %571
        %605 = vrot.lane.b32.xlu0 %v316, 16
        %v606 = vpop.permute.xlu0 %605
        %607 = vrot.lane.b32.xlu0 %v317, 16
        %v608 = vpop.permute.xlu0 %607
        %609 = vrot.lane.b32.xlu0 %v318, 16
        %v610 = vpop.permute.xlu0 %609
        %611 = vrot.lane.b32.xlu0 %v319, 16
        %v612 = vpop.permute.xlu0 %611
        %613 = vrot.lane.b32.xlu0 %v320, 16
        %v614 = vpop.permute.xlu0 %613
        %615 = vrot.lane.b32.xlu0 %v321, 16
        %v616 = vpop.permute.xlu0 %615
        %617 = vrot.lane.b32.xlu0 %v322, 16
        %v618 = vpop.permute.xlu0 %617
        %619 = vrot.lane.b32.xlu0 %v323, 16
        %v620 = vpop.permute.xlu0 %619
        %621 = vrot.lane.b32.xlu0 %v324, 16
        %v622 = vpop.permute.xlu0 %621
        %623 = vrot.lane.b32.xlu0 %v325, 16
        %v624 = vpop.permute.xlu0 %623
        %625 = vrot.lane.b32.xlu0 %v326, 16
        %v626 = vpop.permute.xlu0 %625
        %627 = vrot.lane.b32.xlu0 %v327, 16
        %v628 = vpop.permute.xlu0 %627
        %629 = vrot.lane.b32.xlu0 %v328, 16
        %v630 = vpop.permute.xlu0 %629
        %631 = vrot.lane.b32.xlu0 %v329, 16
        %v632 = vpop.permute.xlu0 %631
        %633 = vrot.lane.b32.xlu0 %v330, 16
        %v634 = vpop.permute.xlu0 %633
        %635 = vrot.lane.b32.xlu0 %v331, 16
        %v636 = vpop.permute.xlu0 %635
        %669 = vrot.lane.b32.xlu0 %v332, 20
        %v670 = vpop.permute.xlu0 %669
        %671 = vrot.lane.b32.xlu0 %v333, 20
        %v672 = vpop.permute.xlu0 %671
        %673 = vrot.lane.b32.xlu0 %v334, 20
        %v674 = vpop.permute.xlu0 %673
        %675 = vrot.lane.b32.xlu0 %v335, 20
        %v676 = vpop.permute.xlu0 %675
        %677 = vrot.lane.b32.xlu0 %v336, 20
        %v678 = vpop.permute.xlu0 %677
        %679 = vrot.lane.b32.xlu0 %v337, 20
        %v680 = vpop.permute.xlu0 %679
        %681 = vrot.lane.b32.xlu0 %v338, 20
        %v682 = vpop.permute.xlu0 %681
        %683 = vrot.lane.b32.xlu0 %v339, 20
        %v684 = vpop.permute.xlu0 %683
        %685 = vrot.lane.b32.xlu0 %v340, 20
        %v686 = vpop.permute.xlu0 %685
        %687 = vrot.lane.b32.xlu0 %v341, 20
        %v688 = vpop.permute.xlu0 %687
        %689 = vrot.lane.b32.xlu0 %v342, 20
        %v690 = vpop.permute.xlu0 %689
        %691 = vrot.lane.b32.xlu0 %v343, 20
        %v692 = vpop.permute.xlu0 %691
        %693 = vrot.lane.b32.xlu0 %v344, 20
        %v694 = vpop.permute.xlu0 %693
        %695 = vrot.lane.b32.xlu0 %v345, 20
        %v696 = vpop.permute.xlu0 %695
        %697 = vrot.lane.b32.xlu0 %v346, 20
        %v698 = vpop.permute.xlu0 %697
        %699 = vrot.lane.b32.xlu0 %v347, 20
        %v700 = vpop.permute.xlu0 %699
        %733 = vrot.lane.b32.xlu0 %v349, 24
        %v734 = vpop.permute.xlu0 %733
        %735 = vrot.lane.b32.xlu0 %v350, 24
        %v736 = vpop.permute.xlu0 %735
        %737 = vrot.lane.b32.xlu0 %v351, 24
        %v738 = vpop.permute.xlu0 %737
        %739 = vrot.lane.b32.xlu0 %v352, 24
        %v740 = vpop.permute.xlu0 %739
        %741 = vrot.lane.b32.xlu0 %v353, 24
        %v742 = vpop.permute.xlu0 %741
        %743 = vrot.lane.b32.xlu0 %v354, 24
        %v744 = vpop.permute.xlu0 %743
        %745 = vrot.lane.b32.xlu0 %v355, 24
        %v746 = vpop.permute.xlu0 %745
        %747 = vrot.lane.b32.xlu0 %v356, 24
        %v748 = vpop.permute.xlu0 %747
        %749 = vrot.lane.b32.xlu0 %v357, 24
        %v750 = vpop.permute.xlu0 %749
        %751 = vrot.lane.b32.xlu0 %v358, 24
        %v752 = vpop.permute.xlu0 %751
        %753 = vrot.lane.b32.xlu0 %v359, 24
        %v754 = vpop.permute.xlu0 %753
        %755 = vrot.lane.b32.xlu0 %v360, 24
        %v756 = vpop.permute.xlu0 %755
        %757 = vrot.lane.b32.xlu0 %v361, 24
        %v758 = vpop.permute.xlu0 %757
        %759 = vrot.lane.b32.xlu0 %v362, 24
        %v760 = vpop.permute.xlu0 %759
        %761 = vrot.lane.b32.xlu0 %v363, 24
        %v762 = vpop.permute.xlu0 %761
        %763 = vrot.lane.b32.xlu0 %v364, 24
        %v764 = vpop.permute.xlu0 %763
        %797 = vrot.lane.b32.xlu0 %v365, 28
        %v798 = vpop.permute.xlu0 %797
        %799 = vrot.lane.b32.xlu0 %v366, 28
        %v800 = vpop.permute.xlu0 %799
        %801 = vrot.lane.b32.xlu0 %v367, 28
        %v802 = vpop.permute.xlu0 %801
        %803 = vrot.lane.b32.xlu0 %v368, 28
        %v804 = vpop.permute.xlu0 %803
        %805 = vrot.lane.b32.xlu0 %v369, 28
        %v806 = vpop.permute.xlu0 %805
        %807 = vrot.lane.b32.xlu0 %v370, 28
        %v808 = vpop.permute.xlu0 %807
        %809 = vrot.lane.b32.xlu0 %v371, 28
        %v810 = vpop.permute.xlu0 %809
        %811 = vrot.lane.b32.xlu0 %v372, 28
        %v812 = vpop.permute.xlu0 %811
        %813 = vrot.lane.b32.xlu0 %v373, 28
        %v814 = vpop.permute.xlu0 %813
        %815 = vrot.lane.b32.xlu0 %v374, 28
        %v816 = vpop.permute.xlu0 %815
        %817 = vrot.lane.b32.xlu0 %v375, 28
        %v818 = vpop.permute.xlu0 %817
        %819 = vrot.lane.b32.xlu0 %v376, 28
        %v820 = vpop.permute.xlu0 %819
        %821 = vrot.lane.b32.xlu0 %v377, 28
        %v822 = vpop.permute.xlu0 %821
        %823 = vrot.lane.b32.xlu0 %v378, 28
        %v824 = vpop.permute.xlu0 %823
        %825 = vrot.lane.b32.xlu0 %v379, 28
        %v826 = vpop.permute.xlu0 %825
        %827 = vrot.lane.b32.xlu0 %v380, 28
        %v828 = vpop.permute.xlu0 %827
        %861 = vrot.lane.b32.xlu0 %v381, 32
        %v862 = vpop.permute.xlu0 %861
        %863 = vrot.lane.b32.xlu0 %v382, 32
        %v864 = vpop.permute.xlu0 %863
        %865 = vrot.lane.b32.xlu0 %v383, 32
        %v866 = vpop.permute.xlu0 %865
        %867 = vrot.lane.b32.xlu0 %v384, 32
        %v868 = vpop.permute.xlu0 %867
        %869 = vrot.lane.b32.xlu0 %v385, 32
        %v870 = vpop.permute.xlu0 %869
        %871 = vrot.lane.b32.xlu0 %v386, 32
        %v872 = vpop.permute.xlu0 %871
        %873 = vrot.lane.b32.xlu0 %v387, 32
        %v874 = vpop.permute.xlu0 %873
        %875 = vrot.lane.b32.xlu0 %v388, 32
        %v876 = vpop.permute.xlu0 %875
        %877 = vrot.lane.b32.xlu0 %v389, 32
        %v878 = vpop.permute.xlu0 %877
        %879 = vrot.lane.b32.xlu0 %v390, 32
        %v880 = vpop.permute.xlu0 %879
        %881 = vrot.lane.b32.xlu0 %v391, 32
        %v882 = vpop.permute.xlu0 %881
        %883 = vrot.lane.b32.xlu0 %v392, 32
        %v884 = vpop.permute.xlu0 %883
        %885 = vrot.lane.b32.xlu0 %v393, 32
        %v886 = vpop.permute.xlu0 %885
        %887 = vrot.lane.b32.xlu0 %v394, 32
        %v888 = vpop.permute.xlu0 %887
        %889 = vrot.lane.b32.xlu0 %v395, 32
        %v890 = vpop.permute.xlu0 %889
        %891 = vrot.lane.b32.xlu0 %v396, 32
        %v892 = vpop.permute.xlu0 %891
        %vm909 = vcmask 31744
        %v910 = vsel %vm909, %v251, %v414
        %v911 = vsel %vm909, %v252, %v416
        %v912 = vsel %vm909, %v253, %v418
        %v913 = vsel %vm909, %v254, %v420
        %v914 = vsel %vm909, %v255, %v422
        %v915 = vsel %vm909, %v256, %v424
        %v916 = vsel %vm909, %v257, %v426
        %v917 = vsel %vm909, %v258, %v428
        %v918 = vsel %vm909, %v259, %v430
        %v919 = vsel %vm909, %v260, %v432
        %v920 = vsel %vm909, %v261, %v434
        %v921 = vsel %vm909, %v262, %v436
        %v922 = vsel %vm909, %v263, %v438
        %v923 = vsel %vm909, %v264, %v440
        %v924 = vsel %vm909, %v265, %v442
        %v925 = vsel %vm909, %v266, %v444
        %vm926 = vcmask 64512
        %v927 = vsel %vm926, %v910, %v478
        %v928 = vsel %vm926, %v911, %v480
        %v929 = vsel %vm926, %v912, %v482
        %v930 = vsel %vm926, %v913, %v484
        %v931 = vsel %vm926, %v914, %v486
        %v932 = vsel %vm926, %v915, %v488
        %v933 = vsel %vm926, %v916, %v490
        %v934 = vsel %vm926, %v917, %v492
        %v935 = vsel %vm926, %v918, %v494
        %v936 = vsel %vm926, %v919, %v496
        %v937 = vsel %vm926, %v920, %v498
        %v938 = vsel %vm926, %v921, %v500
        %v939 = vsel %vm926, %v922, %v502
        %v940 = vsel %vm926, %v923, %v504
        %v941 = vsel %vm926, %v924, %v506
        %v942 = vsel %vm926, %v925, %v508
        %vm943 = vcmask 97280
        %v944 = vsel %vm943, %v927, %v542
        %v945 = vsel %vm943, %v928, %v544
        %v946 = vsel %vm943, %v929, %v546
        %v947 = vsel %vm943, %v930, %v548
        %v948 = vsel %vm943, %v931, %v550
        %v949 = vsel %vm943, %v932, %v552
        %v950 = vsel %vm943, %v933, %v554
        %v951 = vsel %vm943, %v934, %v556
        %v952 = vsel %vm943, %v935, %v558
        %v953 = vsel %vm943, %v936, %v560
        %v954 = vsel %vm943, %v937, %v562
        %v955 = vsel %vm943, %v938, %v564
        %v956 = vsel %vm943, %v939, %v566
        %v957 = vsel %vm943, %v940, %v568
        %v958 = vsel %vm943, %v941, %v570
        %v959 = vsel %vm943, %v942, %v572
        %vm960 = vcmask 130048
        %v961 = vsel %vm960, %v944, %v606
        %v962 = vsel %vm960, %v945, %v608
        %v963 = vsel %vm960, %v946, %v610
        %v964 = vsel %vm960, %v947, %v612
        %v965 = vsel %vm960, %v948, %v614
        %v966 = vsel %vm960, %v949, %v616
        %v967 = vsel %vm960, %v950, %v618
        %v968 = vsel %vm960, %v951, %v620
        %v969 = vsel %vm960, %v952, %v622
        %v970 = vsel %vm960, %v953, %v624
        %v971 = vsel %vm960, %v954, %v626
        %v972 = vsel %vm960, %v955, %v628
        %v973 = vsel %vm960, %v956, %v630
        %v974 = vsel %vm960, %v957, %v632
        %v975 = vsel %vm960, %v958, %v634
        %v976 = vsel %vm960, %v959, %v636
        %vm977 = vcmask 162816
        %v978 = vsel %vm977, %v961, %v670
        %v979 = vsel %vm977, %v962, %v672
        %v980 = vsel %vm977, %v963, %v674
        %v981 = vsel %vm977, %v964, %v676
        %v982 = vsel %vm977, %v965, %v678
        %v983 = vsel %vm977, %v966, %v680
        %v984 = vsel %vm977, %v967, %v682
        %v985 = vsel %vm977, %v968, %v684
        %v986 = vsel %vm977, %v969, %v686
        %v987 = vsel %vm977, %v970, %v688
        %v988 = vsel %vm977, %v971, %v690
        %v989 = vsel %vm977, %v972, %v692
        %v990 = vsel %vm977, %v973, %v694
        %v991 = vsel %vm977, %v974, %v696
        %v992 = vsel %vm977, %v975, %v698
        %v993 = vsel %vm977, %v976, %v700
        %vm994 = vcmask 195584
        %v995 = vsel %vm994, %v978, %v734
        %v996 = vsel %vm994, %v979, %v736
        %v997 = vsel %vm994, %v980, %v738
        %v998 = vsel %vm994, %v981, %v740
        %v999 = vsel %vm994, %v982, %v742
        %v1000 = vsel %vm994, %v983, %v744
        %v1001 = vsel %vm994, %v984, %v746
        %v1002 = vsel %vm994, %v985, %v748
        %v1003 = vsel %vm994, %v986, %v750
        %v1004 = vsel %vm994, %v987, %v752
        %v1005 = vsel %vm994, %v988, %v754
        %v1006 = vsel %vm994, %v989, %v756
        %v1007 = vsel %vm994, %v990, %v758
        %v1008 = vsel %vm994, %v991, %v760
        %v1009 = vsel %vm994, %v992, %v762
        %v1010 = vsel %vm994, %v993, %v764
        %vm1011 = vcmask 228352
        %v1012 = vsel %vm1011, %v995, %v798
        %v1013 = vsel %vm1011, %v996, %v800
        %v1014 = vsel %vm1011, %v997, %v802
        %v1015 = vsel %vm1011, %v998, %v804
        %v1016 = vsel %vm1011, %v999, %v806
        %v1017 = vsel %vm1011, %v1000, %v808
        %v1018 = vsel %vm1011, %v1001, %v810
        %v1019 = vsel %vm1011, %v1002, %v812
        %v1020 = vsel %vm1011, %v1003, %v814
        %v1021 = vsel %vm1011, %v1004, %v816
        %v1022 = vsel %vm1011, %v1005, %v818
        %v1023 = vsel %vm1011, %v1006, %v820
        %v1024 = vsel %vm1011, %v1007, %v822
        %v1025 = vsel %vm1011, %v1008, %v824
        %v1026 = vsel %vm1011, %v1009, %v826
        %v1027 = vsel %vm1011, %v1010, %v828
        %vm1028 = vcmask 261120
        %v1029 = vsel %vm1028, %v1012, %v862
        %v1030 = vsel %vm1028, %v1013, %v864
        %v1031 = vsel %vm1028, %v1014, %v866
        %v1032 = vsel %vm1028, %v1015, %v868
        %v1033 = vsel %vm1028, %v1016, %v870
        %v1034 = vsel %vm1028, %v1017, %v872
        %v1035 = vsel %vm1028, %v1018, %v874
        %v1036 = vsel %vm1028, %v1019, %v876
        %v1037 = vsel %vm1028, %v1020, %v878
        %v1038 = vsel %vm1028, %v1021, %v880
        %v1039 = vsel %vm1028, %v1022, %v882
        %v1040 = vsel %vm1028, %v1023, %v884
        %v1041 = vsel %vm1028, %v1024, %v886
        %v1042 = vsel %vm1028, %v1025, %v888
        %v1043 = vsel %vm1028, %v1026, %v890
        %v1044 = vsel %vm1028, %v1027, %v892
        %v1045 = vld [vmem:[%s1] sm:$0xff]
        %v1046 = vld [vmem:[%s1 + $0x8] sm:$0xff]
        %v1047 = vld [vmem:[%s1 + $0x10] sm:$0xff]
        %v1048 = vld [vmem:[%s1 + $0x18] sm:$0xff]
        %v1049 = vld [vmem:[%s1 + $0x20] sm:$0xf]
        %v1050 = vld [vmem:[%s2] sm:$0x1]
        %v1052 = vlaneseq
        %v1053 = vshrl.u32 %v1052, 7
        %v1054 = vsub.s32 0, %v1053
        %v1055 = vrot.slane %v1050, %v1054
        %vm1057 = vcmask 293888
        %v1059 = vsel %vm1057, %v1029, 0
        %v1062 = vsel %vm1057, %v1030, 0
        %v1065 = vsel %vm1057, %v1031, 0
        %v1068 = vsel %vm1057, %v1032, 0
        %v1071 = vsel %vm1057, %v1033, 0
        %v1074 = vsel %vm1057, %v1034, 0
        %v1077 = vsel %vm1057, %v1035, 0
        %v1080 = vsel %vm1057, %v1036, 0
        %v1083 = vsel %vm1057, %v1037, 0
        %v1086 = vsel %vm1057, %v1038, 0
        %v1089 = vsel %vm1057, %v1039, 0
        %v1092 = vsel %vm1057, %v1040, 0
        %v1095 = vsel %vm1057, %v1041, 0
        %v1098 = vsel %vm1057, %v1042, 0
        %v1101 = vsel %vm1057, %v1043, 0
        %v1104 = vsel %vm1057, %v1044, 0
        %vm1106 = vcmask 1043456
        %v1108 = vsel %vm1106, %v1049, 0
        %1110 = vmatprep.subr.mxu0 0.0
        %1111 = vmatpush1.msra.mxu0 0.0
        %1112 = vmatprep.subr.mxu0 0.0
        %1113 = vmatpush1.msra.mxu0 0.0
        %1114 = vmatprep.subr.mxu0 0.0
        %1115 = vmatpush1.msra.mxu0 0.0
        %1116 = vmatprep.subr.mxu0 0.0
        %1117 = vmatpush1.msra.mxu0 0.0
        %1118 = vmatprep.subr.mxu0 0.0
        %1119 = vmatpush1.msra.mxu0 0.0
        %1120 = vmatprep.subr.mxu0 0.0
        %1121 = vmatpush1.msra.mxu0 0.0
        %1122 = vmatprep.subr.mxu0 0.0
        %1123 = vmatpush1.msra.mxu0 0.0
        %1124 = vmatprep.subr.mxu0 0.0
        %1125 = vmatpush1.msra.mxu0 0.0
        %1126 = vmatprep.subr.mxu0 0.0
        %1127 = vmatpush1.msra.mxu0 0.0
        %1128 = vmatprep.subr.mxu0 0.0
        %1129 = vmatpush1.msra.mxu0 0.0
        %1130 = vmatprep.subr.mxu0 0.0
        %1131 = vmatpush1.msra.mxu0 0.0
        %1132 = vmatprep.subr.mxu0 0.0
        %1133 = vmatpush1.msra.mxu0 %v1108
        %1134 = vmatprep.subr.mxu0 0.0
        %1135 = vmatpush1.msra.mxu0 %v1048
        %1136 = vmatprep.subr.mxu0 0.0
        %1137 = vmatpush1.msra.mxu0 %v1047
        %1138 = vmatprep.subr.mxu0 0.0
        %1139 = vmatpush1.msra.mxu0 %v1046
        %1140 = vmatprep.subr.mxu0 0.0
        %1141 = vmatpush1.msra.mxu0 %v1045
        %1142 = vmatprep.subr.mxu0 0.0
        %1143 = vmatpush2.msra.mxu0 0.0
        %1144 = vmatprep.subr.mxu0 0.0
        %1145 = vmatpush2.msra.mxu0 0.0
        %1146 = vmatprep.subr.mxu0 0.0
        %1147 = vmatpush2.msra.mxu0 0.0
        %1148 = vmatprep.subr.mxu0 0.0
        %1149 = vmatpush2.msra.mxu0 0.0
        %1150 = vmatprep.subr.mxu0 0.0
        %1151 = vmatpush2.msra.mxu0 0.0
        %1152 = vmatprep.subr.mxu0 0.0
        %1153 = vmatpush2.msra.mxu0 0.0
        %1154 = vmatprep.subr.mxu0 0.0
        %1155 = vmatpush2.msra.mxu0 0.0
        %1156 = vmatprep.subr.mxu0 0.0
        %1157 = vmatpush2.msra.mxu0 0.0
        %1158 = vmatprep.subr.mxu0 0.0
        %1159 = vmatpush2.msra.mxu0 0.0
        %1160 = vmatprep.subr.mxu0 0.0
        %1161 = vmatpush2.msra.mxu0 0.0
        %1162 = vmatprep.subr.mxu0 0.0
        %1163 = vmatpush2.msra.mxu0 0.0
        %1164 = vmatprep.subr.mxu0 0.0
        %1165 = vmatpush2.msra.mxu0 0.0
        %1166 = vmatprep.subr.mxu0 0.0
        %1167 = vmatpush2.msra.mxu0 0.0
        %1168 = vmatprep.subr.mxu0 0.0
        %1169 = vmatpush2.msra.mxu0 0.0
        %1170 = vmatprep.subr.mxu0 0.0
        %1171 = vmatpush2.msra.mxu0 0.0
        %1172 = vmatprep.subr.mxu0 0.0
        %1173 = vmatpush2.msra.mxu0 0.0
        %1174 = vmatprep.mubr.f32.mxu0 0.0
        %1175 = vmatmul.mubr.f32.gmra.mxu0 %v1059
        %v1176 = vpop.f32.mrf.mxu0
        %v1177 = vadd.f32 %v1055, %v1176
        %v1178 = vpop.f32.mrf.mxu0
        %1179 = vmatprep.mubr.f32.mxu0 0.0
        %1180 = vmatmul.mubr.f32.gmra.mxu0 %v1062
        %v1181 = vpop.f32.mrf.mxu0
        %v1182 = vadd.f32 %v1055, %v1181
        %v1183 = vpop.f32.mrf.mxu0
        %1184 = vmatprep.mubr.f32.mxu0 0.0
        %1185 = vmatmul.mubr.f32.gmra.mxu0 %v1065
        %v1186 = vpop.f32.mrf.mxu0
        %v1187 = vadd.f32 %v1055, %v1186
        %v1188 = vpop.f32.mrf.mxu0
        %1189 = vmatprep.mubr.f32.mxu0 0.0
        %1190 = vmatmul.mubr.f32.gmra.mxu0 %v1068
        %v1191 = vpop.f32.mrf.mxu0
        %v1192 = vadd.f32 %v1055, %v1191
        %v1193 = vpop.f32.mrf.mxu0
        %1194 = vmatprep.mubr.f32.mxu0 0.0
        %1195 = vmatmul.mubr.f32.gmra.mxu0 %v1071
        %v1196 = vpop.f32.mrf.mxu0
        %v1197 = vadd.f32 %v1055, %v1196
        %v1198 = vpop.f32.mrf.mxu0
        %1199 = vmatprep.mubr.f32.mxu0 0.0
        %1200 = vmatmul.mubr.f32.gmra.mxu0 %v1074
        %v1201 = vpop.f32.mrf.mxu0
        %v1202 = vadd.f32 %v1055, %v1201
        %v1203 = vpop.f32.mrf.mxu0
        %1204 = vmatprep.mubr.f32.mxu0 0.0
        %1205 = vmatmul.mubr.f32.gmra.mxu0 %v1077
        %v1206 = vpop.f32.mrf.mxu0
        %v1207 = vadd.f32 %v1055, %v1206
        %v1208 = vpop.f32.mrf.mxu0
        %1209 = vmatprep.mubr.f32.mxu0 0.0
        %1210 = vmatmul.mubr.f32.gmra.mxu0 %v1080
        %v1211 = vpop.f32.mrf.mxu0
        %v1212 = vadd.f32 %v1055, %v1211
        %v1213 = vpop.f32.mrf.mxu0
        %1214 = vmatprep.mubr.f32.mxu0 0.0
        %1215 = vmatmul.mubr.f32.gmra.mxu0 %v1083
        %v1216 = vpop.f32.mrf.mxu0
        %v1217 = vadd.f32 %v1055, %v1216
        %v1218 = vpop.f32.mrf.mxu0
        %1219 = vmatprep.mubr.f32.mxu0 0.0
        %1220 = vmatmul.mubr.f32.gmra.mxu0 %v1086
        %v1221 = vpop.f32.mrf.mxu0
        %v1222 = vadd.f32 %v1055, %v1221
        %v1223 = vpop.f32.mrf.mxu0
        %1224 = vmatprep.mubr.f32.mxu0 0.0
        %1225 = vmatmul.mubr.f32.gmra.mxu0 %v1089
        %v1226 = vpop.f32.mrf.mxu0
        %v1227 = vadd.f32 %v1055, %v1226
        %v1228 = vpop.f32.mrf.mxu0
        %1229 = vmatprep.mubr.f32.mxu0 0.0
        %1230 = vmatmul.mubr.f32.gmra.mxu0 %v1092
        %v1231 = vpop.f32.mrf.mxu0
        %v1232 = vadd.f32 %v1055, %v1231
        %v1233 = vpop.f32.mrf.mxu0
        %1234 = vmatprep.mubr.f32.mxu0 0.0
        %1235 = vmatmul.mubr.f32.gmra.mxu0 %v1095
        %v1236 = vpop.f32.mrf.mxu0
        %v1237 = vadd.f32 %v1055, %v1236
        %v1238 = vpop.f32.mrf.mxu0
        %1239 = vmatprep.mubr.f32.mxu0 0.0
        %1240 = vmatmul.mubr.f32.gmra.mxu0 %v1098
        %v1241 = vpop.f32.mrf.mxu0
        %v1242 = vadd.f32 %v1055, %v1241
        %v1243 = vpop.f32.mrf.mxu0
        %1244 = vmatprep.mubr.f32.mxu0 0.0
        %1245 = vmatmul.mubr.f32.gmra.mxu0 %v1101
        %v1246 = vpop.f32.mrf.mxu0
        %v1247 = vadd.f32 %v1055, %v1246
        %v1248 = vpop.f32.mrf.mxu0
        %1249 = vmatprep.mubr.f32.mxu0 0.0
        %1250 = vmatmul.mubr.f32.gmra.mxu0 %v1104
        %v1251 = vpop.f32.mrf.mxu0
        %v1252 = vadd.f32 %v1055, %v1251
        %v1253 = vpop.f32.mrf.mxu0
        %1254 = vdwg.mxu0
        %v1255 = vmax.f32 %v1177, 0.0
        %v1256 = vmax.f32 %v1182, 0.0
        %v1257 = vmax.f32 %v1187, 0.0
        %v1258 = vmax.f32 %v1192, 0.0
        %v1259 = vmax.f32 %v1197, 0.0
        %v1260 = vmax.f32 %v1202, 0.0
        %v1261 = vmax.f32 %v1207, 0.0
        %v1262 = vmax.f32 %v1212, 0.0
        %v1263 = vmax.f32 %v1217, 0.0
        %v1264 = vmax.f32 %v1222, 0.0
        %v1265 = vmax.f32 %v1227, 0.0
        %v1266 = vmax.f32 %v1232, 0.0
        %v1267 = vmax.f32 %v1237, 0.0
        %v1268 = vmax.f32 %v1242, 0.0
        %v1269 = vmax.f32 %v1247, 0.0
        %v1270 = vmax.f32 %v1252, 0.0
        %1271 = vst.msk [vmem:[%s248] sm:$0xff] %vm926, %v1255
        %1272 = vst.msk [vmem:[%s248 + $0x8] sm:$0xff] %vm926, %v1256
        %1273 = vst.msk [vmem:[%s248 + $0x10] sm:$0xff] %vm926, %v1257
        %1274 = vst.msk [vmem:[%s248 + $0x18] sm:$0xff] %vm926, %v1258
        %1275 = vst.msk [vmem:[%s248 + $0x20] sm:$0xff] %vm926, %v1259
        %1276 = vst.msk [vmem:[%s248 + $0x28] sm:$0xff] %vm926, %v1260
        %1277 = vst.msk [vmem:[%s248 + $0x30] sm:$0xff] %vm926, %v1261
        %1278 = vst.msk [vmem:[%s248 + $0x38] sm:$0xff] %vm926, %v1262
        %1279 = vst.msk [vmem:[%s248 + $0x40] sm:$0xff] %vm926, %v1263
        %1280 = vst.msk [vmem:[%s248 + $0x48] sm:$0xff] %vm926, %v1264
        %1281 = vst.msk [vmem:[%s248 + $0x50] sm:$0xff] %vm926, %v1265
        %1282 = vst.msk [vmem:[%s248 + $0x58] sm:$0xff] %vm926, %v1266
        %1283 = vst.msk [vmem:[%s248 + $0x60] sm:$0xff] %vm926, %v1267
        %1284 = vst.msk [vmem:[%s248 + $0x68] sm:$0xff] %vm926, %v1268
        %1285 = vst.msk [vmem:[%s248 + $0x70] sm:$0xff] %vm926, %v1269
        %1286 = vst.msk [vmem:[%s248 + $0x78] sm:$0xff] %vm926, %v1270
        %v1287 = vmax.f32 %v1255, %v1257
        %v1288 = vmax.f32 %v1256, %v1258
        %v1289 = vmax.f32 %v1259, %v1261
        %v1290 = vmax.f32 %v1260, %v1262
        %v1291 = vmax.f32 %v1263, %v1265
        %v1292 = vmax.f32 %v1264, %v1266
        %v1293 = vmax.f32 %v1267, %v1269
        %v1294 = vmax.f32 %v1268, %v1270
        %v1303 = vcombine.high %v1287, %v1287
        %v1305 = vunpack.c.l.s4 1983009808
        %v1306 = vunpack.c.0.s8 %v1305
        %v1307 = vlaneseq
        %v1308 = vshrl.u32 %v1307, 7
        %v1309 = vsub.s32 %v1306, %v1308
        %v1310 = vrot.slane %v1287, %v1309
        %v1312 = vunpack.c.l.s4 1983009808
        %v1313 = vunpack.c.0.s8 %v1312
        %v1314 = vlaneseq
        %v1315 = vshrl.u32 %v1314, 7
        %v1316 = vsub.s32 %v1313, %v1315
        %v1317 = vrot.slane %v1303, %v1316
        %v1318 = vcombine.high %v1310, %v1310
        %v1319 = vcombine.high %v1317, %v1317
        %v1320 = vcombine.high %v1288, %v1288
        %v1322 = vunpack.c.l.s4 1983009808
        %v1323 = vunpack.c.0.s8 %v1322
        %v1324 = vlaneseq
        %v1325 = vshrl.u32 %v1324, 7
        %v1326 = vsub.s32 %v1323, %v1325
        %v1327 = vrot.slane %v1288, %v1326
        %v1329 = vunpack.c.l.s4 1983009808
        %v1330 = vunpack.c.0.s8 %v1329
        %v1331 = vlaneseq
        %v1332 = vshrl.u32 %v1331, 7
        %v1333 = vsub.s32 %v1330, %v1332
        %v1334 = vrot.slane %v1320, %v1333
        %v1335 = vcombine.high %v1327, %v1327
        %v1336 = vcombine.high %v1334, %v1334
        %v1337 = vcombine.high %v1289, %v1289
        %v1339 = vunpack.c.l.s4 1983009808
        %v1340 = vunpack.c.0.s8 %v1339
        %v1341 = vlaneseq
        %v1342 = vshrl.u32 %v1341, 7
        %v1343 = vsub.s32 %v1340, %v1342
        %v1344 = vrot.slane %v1289, %v1343
        %v1346 = vunpack.c.l.s4 1983009808
        %v1347 = vunpack.c.0.s8 %v1346
        %v1348 = vlaneseq
        %v1349 = vshrl.u32 %v1348, 7
        %v1350 = vsub.s32 %v1347, %v1349
        %v1351 = vrot.slane %v1337, %v1350
        %v1352 = vcombine.high %v1344, %v1344
        %v1353 = vcombine.high %v1351, %v1351
        %v1354 = vcombine.high %v1290, %v1290
        %v1356 = vunpack.c.l.s4 1983009808
        %v1357 = vunpack.c.0.s8 %v1356
        %v1358 = vlaneseq
        %v1359 = vshrl.u32 %v1358, 7
        %v1360 = vsub.s32 %v1357, %v1359
        %v1361 = vrot.slane %v1290, %v1360
        %v1363 = vunpack.c.l.s4 1983009808
        %v1364 = vunpack.c.0.s8 %v1363
        %v1365 = vlaneseq
        %v1366 = vshrl.u32 %v1365, 7
        %v1367 = vsub.s32 %v1364, %v1366
        %v1368 = vrot.slane %v1354, %v1367
        %v1369 = vcombine.high %v1361, %v1361
        %v1370 = vcombine.high %v1368, %v1368
        %v1371 = vcombine.high %v1291, %v1291
        %v1373 = vunpack.c.l.s4 1983009808
        %v1374 = vunpack.c.0.s8 %v1373
        %v1375 = vlaneseq
        %v1376 = vshrl.u32 %v1375, 7
        %v1377 = vsub.s32 %v1374, %v1376
        %v1378 = vrot.slane %v1291, %v1377
        %v1380 = vunpack.c.l.s4 1983009808
        %v1381 = vunpack.c.0.s8 %v1380
        %v1382 = vlaneseq
        %v1383 = vshrl.u32 %v1382, 7
        %v1384 = vsub.s32 %v1381, %v1383
        %v1385 = vrot.slane %v1371, %v1384
        %v1386 = vcombine.high %v1378, %v1378
        %v1387 = vcombine.high %v1385, %v1385
        %v1388 = vcombine.high %v1292, %v1292
        %v1390 = vunpack.c.l.s4 1983009808
        %v1391 = vunpack.c.0.s8 %v1390
        %v1392 = vlaneseq
        %v1393 = vshrl.u32 %v1392, 7
        %v1394 = vsub.s32 %v1391, %v1393
        %v1395 = vrot.slane %v1292, %v1394
        %v1397 = vunpack.c.l.s4 1983009808
        %v1398 = vunpack.c.0.s8 %v1397
        %v1399 = vlaneseq
        %v1400 = vshrl.u32 %v1399, 7
        %v1401 = vsub.s32 %v1398, %v1400
        %v1402 = vrot.slane %v1388, %v1401
        %v1403 = vcombine.high %v1395, %v1395
        %v1404 = vcombine.high %v1402, %v1402
        %v1405 = vcombine.high %v1293, %v1293
        %v1407 = vunpack.c.l.s4 1983009808
        %v1408 = vunpack.c.0.s8 %v1407
        %v1409 = vlaneseq
        %v1410 = vshrl.u32 %v1409, 7
        %v1411 = vsub.s32 %v1408, %v1410
        %v1412 = vrot.slane %v1293, %v1411
        %v1414 = vunpack.c.l.s4 1983009808
        %v1415 = vunpack.c.0.s8 %v1414
        %v1416 = vlaneseq
        %v1417 = vshrl.u32 %v1416, 7
        %v1418 = vsub.s32 %v1415, %v1417
        %v1419 = vrot.slane %v1405, %v1418
        %v1420 = vcombine.high %v1412, %v1412
        %v1421 = vcombine.high %v1419, %v1419
        %v1422 = vcombine.high %v1294, %v1294
        %v1424 = vunpack.c.l.s4 1983009808
        %v1425 = vunpack.c.0.s8 %v1424
        %v1426 = vlaneseq
        %v1427 = vshrl.u32 %v1426, 7
        %v1428 = vsub.s32 %v1425, %v1427
        %v1429 = vrot.slane %v1294, %v1428
        %v1431 = vunpack.c.l.s4 1983009808
        %v1432 = vunpack.c.0.s8 %v1431
        %v1433 = vlaneseq
        %v1434 = vshrl.u32 %v1433, 7
        %v1435 = vsub.s32 %v1432, %v1434
        %v1436 = vrot.slane %v1422, %v1435
        %v1437 = vcombine.high %v1429, %v1429
        %v1438 = vcombine.high %v1436, %v1436
        %v1471 = vrot.slane %v1310, 7
        %v1472 = vrot.slane %v1471, 2
        %v1473 = vrot.slane %v1318, 7
        %v1474 = vrot.slane %v1473, 2
        %v1475 = vrot.slane %v1317, 7
        %v1476 = vrot.slane %v1475, 2
        %v1477 = vrot.slane %v1319, 7
        %v1478 = vrot.slane %v1477, 2
        %v1479 = vrot.slane %v1327, 7
        %v1480 = vrot.slane %v1479, 2
        %v1481 = vrot.slane %v1335, 7
        %v1482 = vrot.slane %v1481, 2
        %v1483 = vrot.slane %v1334, 7
        %v1484 = vrot.slane %v1483, 2
        %v1485 = vrot.slane %v1336, 7
        %v1486 = vrot.slane %v1485, 2
        %v1487 = vrot.slane %v1344, 7
        %v1488 = vrot.slane %v1487, 2
        %v1489 = vrot.slane %v1352, 7
        %v1490 = vrot.slane %v1489, 2
        %v1491 = vrot.slane %v1351, 7
        %v1492 = vrot.slane %v1491, 2
        %v1493 = vrot.slane %v1353, 7
        %v1494 = vrot.slane %v1493, 2
        %v1495 = vrot.slane %v1361, 7
        %v1496 = vrot.slane %v1495, 2
        %v1497 = vrot.slane %v1369, 7
        %v1498 = vrot.slane %v1497, 2
        %v1499 = vrot.slane %v1368, 7
        %v1500 = vrot.slane %v1499, 2
        %v1501 = vrot.slane %v1370, 7
        %v1502 = vrot.slane %v1501, 2
        %v1503 = vrot.slane %v1378, 7
        %v1504 = vrot.slane %v1503, 2
        %v1505 = vrot.slane %v1386, 7
        %v1506 = vrot.slane %v1505, 2
        %v1507 = vrot.slane %v1385, 7
        %v1508 = vrot.slane %v1507, 2
        %v1509 = vrot.slane %v1387, 7
        %v1510 = vrot.slane %v1509, 2
        %v1511 = vrot.slane %v1395, 7
        %v1512 = vrot.slane %v1511, 2
        %v1513 = vrot.slane %v1403, 7
        %v1514 = vrot.slane %v1513, 2
        %v1515 = vrot.slane %v1402, 7
        %v1516 = vrot.slane %v1515, 2
        %v1517 = vrot.slane %v1404, 7
        %v1518 = vrot.slane %v1517, 2
        %v1519 = vrot.slane %v1412, 7
        %v1520 = vrot.slane %v1519, 2
        %v1521 = vrot.slane %v1420, 7
        %v1522 = vrot.slane %v1521, 2
        %v1523 = vrot.slane %v1419, 7
        %v1524 = vrot.slane %v1523, 2
        %v1525 = vrot.slane %v1421, 7
        %v1526 = vrot.slane %v1525, 2
        %v1527 = vrot.slane %v1429, 7
        %v1528 = vrot.slane %v1527, 2
        %v1529 = vrot.slane %v1437, 7
        %v1530 = vrot.slane %v1529, 2
        %v1531 = vrot.slane %v1436, 7
        %v1532 = vrot.slane %v1531, 2
        %v1533 = vrot.slane %v1438, 7
        %v1534 = vrot.slane %v1533, 2
        %v1567 = vmax.f32 %v1310, %v1472
        %v1568 = vmax.f32 %v1318, %v1474
        %v1569 = vmax.f32 %v1317, %v1476
        %v1570 = vmax.f32 %v1319, %v1478
        %v1571 = vmax.f32 %v1327, %v1480
        %v1572 = vmax.f32 %v1335, %v1482
        %v1573 = vmax.f32 %v1334, %v1484
        %v1574 = vmax.f32 %v1336, %v1486
        %v1575 = vmax.f32 %v1344, %v1488
        %v1576 = vmax.f32 %v1352, %v1490
        %v1577 = vmax.f32 %v1351, %v1492
        %v1578 = vmax.f32 %v1353, %v1494
        %v1579 = vmax.f32 %v1361, %v1496
        %v1580 = vmax.f32 %v1369, %v1498
        %v1581 = vmax.f32 %v1368, %v1500
        %v1582 = vmax.f32 %v1370, %v1502
        %v1583 = vmax.f32 %v1378, %v1504
        %v1584 = vmax.f32 %v1386, %v1506
        %v1585 = vmax.f32 %v1385, %v1508
        %v1586 = vmax.f32 %v1387, %v1510
        %v1587 = vmax.f32 %v1395, %v1512
        %v1588 = vmax.f32 %v1403, %v1514
        %v1589 = vmax.f32 %v1402, %v1516
        %v1590 = vmax.f32 %v1404, %v1518
        %v1591 = vmax.f32 %v1412, %v1520
        %v1592 = vmax.f32 %v1420, %v1522
        %v1593 = vmax.f32 %v1419, %v1524
        %v1594 = vmax.f32 %v1421, %v1526
        %v1595 = vmax.f32 %v1429, %v1528
        %v1596 = vmax.f32 %v1437, %v1530
        %v1597 = vmax.f32 %v1436, %v1532
        %v1598 = vmax.f32 %v1438, %v1534
        %v1631 = vlaneseq
        %v1632 = vshrl.u32 %v1631, 7
        %v1633 = vsub.s32 0, %v1632
        %v1634 = vrot.slane %v1567, %v1633
        %v1635 = vlaneseq
        %v1636 = vshrl.u32 %v1635, 7
        %v1637 = vsub.s32 0, %v1636
        %v1638 = vrot.slane %v1568, %v1637
        %v1639 = vlaneseq
        %v1640 = vshrl.u32 %v1639, 7
        %v1641 = vsub.s32 0, %v1640
        %v1642 = vrot.slane %v1569, %v1641
        %v1643 = vlaneseq
        %v1644 = vshrl.u32 %v1643, 7
        %v1645 = vsub.s32 0, %v1644
        %v1646 = vrot.slane %v1570, %v1645
        %v1647 = vlaneseq
        %v1648 = vshrl.u32 %v1647, 7
        %v1649 = vsub.s32 0, %v1648
        %v1650 = vrot.slane %v1571, %v1649
        %v1651 = vlaneseq
        %v1652 = vshrl.u32 %v1651, 7
        %v1653 = vsub.s32 0, %v1652
        %v1654 = vrot.slane %v1572, %v1653
        %v1655 = vlaneseq
        %v1656 = vshrl.u32 %v1655, 7
        %v1657 = vsub.s32 0, %v1656
        %v1658 = vrot.slane %v1573, %v1657
        %v1659 = vlaneseq
        %v1660 = vshrl.u32 %v1659, 7
        %v1661 = vsub.s32 0, %v1660
        %v1662 = vrot.slane %v1574, %v1661
        %v1663 = vlaneseq
        %v1664 = vshrl.u32 %v1663, 7
        %v1665 = vsub.s32 0, %v1664
        %v1666 = vrot.slane %v1575, %v1665
        %v1667 = vlaneseq
        %v1668 = vshrl.u32 %v1667, 7
        %v1669 = vsub.s32 0, %v1668
        %v1670 = vrot.slane %v1576, %v1669
        %v1671 = vlaneseq
        %v1672 = vshrl.u32 %v1671, 7
        %v1673 = vsub.s32 0, %v1672
        %v1674 = vrot.slane %v1577, %v1673
        %v1675 = vlaneseq
        %v1676 = vshrl.u32 %v1675, 7
        %v1677 = vsub.s32 0, %v1676
        %v1678 = vrot.slane %v1578, %v1677
        %v1679 = vlaneseq
        %v1680 = vshrl.u32 %v1679, 7
        %v1681 = vsub.s32 0, %v1680
        %v1682 = vrot.slane %v1579, %v1681
        %v1683 = vlaneseq
        %v1684 = vshrl.u32 %v1683, 7
        %v1685 = vsub.s32 0, %v1684
        %v1686 = vrot.slane %v1580, %v1685
        %v1687 = vlaneseq
        %v1688 = vshrl.u32 %v1687, 7
        %v1689 = vsub.s32 0, %v1688
        %v1690 = vrot.slane %v1581, %v1689
        %v1691 = vlaneseq
        %v1692 = vshrl.u32 %v1691, 7
        %v1693 = vsub.s32 0, %v1692
        %v1694 = vrot.slane %v1582, %v1693
        %v1695 = vlaneseq
        %v1696 = vshrl.u32 %v1695, 7
        %v1697 = vsub.s32 0, %v1696
        %v1698 = vrot.slane %v1583, %v1697
        %v1699 = vlaneseq
        %v1700 = vshrl.u32 %v1699, 7
        %v1701 = vsub.s32 0, %v1700
        %v1702 = vrot.slane %v1584, %v1701
        %v1703 = vlaneseq
        %v1704 = vshrl.u32 %v1703, 7
        %v1705 = vsub.s32 0, %v1704
        %v1706 = vrot.slane %v1585, %v1705
        %v1707 = vlaneseq
        %v1708 = vshrl.u32 %v1707, 7
        %v1709 = vsub.s32 0, %v1708
        %v1710 = vrot.slane %v1586, %v1709
        %v1711 = vlaneseq
        %v1712 = vshrl.u32 %v1711, 7
        %v1713 = vsub.s32 0, %v1712
        %v1714 = vrot.slane %v1587, %v1713
        %v1715 = vlaneseq
        %v1716 = vshrl.u32 %v1715, 7
        %v1717 = vsub.s32 0, %v1716
        %v1718 = vrot.slane %v1588, %v1717
        %v1719 = vlaneseq
        %v1720 = vshrl.u32 %v1719, 7
        %v1721 = vsub.s32 0, %v1720
        %v1722 = vrot.slane %v1589, %v1721
        %v1723 = vlaneseq
        %v1724 = vshrl.u32 %v1723, 7
        %v1725 = vsub.s32 0, %v1724
        %v1726 = vrot.slane %v1590, %v1725
        %v1727 = vlaneseq
        %v1728 = vshrl.u32 %v1727, 7
        %v1729 = vsub.s32 0, %v1728
        %v1730 = vrot.slane %v1591, %v1729
        %v1731 = vlaneseq
        %v1732 = vshrl.u32 %v1731, 7
        %v1733 = vsub.s32 0, %v1732
        %v1734 = vrot.slane %v1592, %v1733
        %v1735 = vlaneseq
        %v1736 = vshrl.u32 %v1735, 7
        %v1737 = vsub.s32 0, %v1736
        %v1738 = vrot.slane %v1593, %v1737
        %v1739 = vlaneseq
        %v1740 = vshrl.u32 %v1739, 7
        %v1741 = vsub.s32 0, %v1740
        %v1742 = vrot.slane %v1594, %v1741
        %v1743 = vlaneseq
        %v1744 = vshrl.u32 %v1743, 7
        %v1745 = vsub.s32 0, %v1744
        %v1746 = vrot.slane %v1595, %v1745
        %v1747 = vlaneseq
        %v1748 = vshrl.u32 %v1747, 7
        %v1749 = vsub.s32 0, %v1748
        %v1750 = vrot.slane %v1596, %v1749
        %v1751 = vlaneseq
        %v1752 = vshrl.u32 %v1751, 7
        %v1753 = vsub.s32 0, %v1752
        %v1754 = vrot.slane %v1597, %v1753
        %v1755 = vlaneseq
        %v1756 = vshrl.u32 %v1755, 7
        %v1757 = vsub.s32 0, %v1756
        %v1758 = vrot.slane %v1598, %v1757
        %vm1759 = vcmask 1041409
        %v1760 = vsel %vm1759, %v1638, %v1634
        %vm1761 = vcmask 1042434
        %v1762 = vsel %vm1761, %v1642, %v1760
        %vm1763 = vcmask 1043459
        %v1764 = vsel %vm1763, %v1646, %v1762
        %vm1765 = vcmask 1044484
        %v1766 = vsel %vm1765, %v1650, %v1764
        %vm1767 = vcmask 1045509
        %v1768 = vsel %vm1767, %v1654, %v1766
        %vm1769 = vcmask 1046534
        %v1770 = vsel %vm1769, %v1658, %v1768
        %vm1771 = vcmask 1047559
        %v1772 = vsel %vm1771, %v1662, %v1770
        %v1773 = vsel %vm1759, %v1670, %v1666
        %v1774 = vsel %vm1761, %v1674, %v1773
        %v1775 = vsel %vm1763, %v1678, %v1774
        %v1776 = vsel %vm1765, %v1682, %v1775
        %v1777 = vsel %vm1767, %v1686, %v1776
        %v1778 = vsel %vm1769, %v1690, %v1777
        %v1779 = vsel %vm1771, %v1694, %v1778
        %v1780 = vsel %vm1759, %v1702, %v1698
        %v1781 = vsel %vm1761, %v1706, %v1780
        %v1782 = vsel %vm1763, %v1710, %v1781
        %v1783 = vsel %vm1765, %v1714, %v1782
        %v1784 = vsel %vm1767, %v1718, %v1783
        %v1785 = vsel %vm1769, %v1722, %v1784
        %v1786 = vsel %vm1771, %v1726, %v1785
        %v1787 = vsel %vm1759, %v1734, %v1730
        %v1788 = vsel %vm1761, %v1738, %v1787
        %v1789 = vsel %vm1763, %v1742, %v1788
        %v1790 = vsel %vm1765, %v1746, %v1789
        %v1791 = vsel %vm1767, %v1750, %v1790
        %v1792 = vsel %vm1769, %v1754, %v1791
        %v1793 = vsel %vm1771, %v1758, %v1792
        %1798 = vst.msk [vmem:[%s229] sm:$0xff] %vm926, %v1772
        %1799 = vst.msk [vmem:[%s229 + $0x8] sm:$0xff] %vm926, %v1779
        %1800 = vst.msk [vmem:[%s229 + $0x10] sm:$0xff] %vm926, %v1786
        %1801 = vst.msk [vmem:[%s229 + $0x18] sm:$0xff] %vm926, %v1793
        %s1802 = smul.u32 8, %s24
        %p1803 = scmp.lt.s32.totalorder %s23, 1
        %s1804 = scalar_select %p1803, %s23, 1
        %p1805 = scmp.lt.s32.totalorder %s1802, 15
        %s1806 = scalar_select %p1805, %s1802, 15
        %s1807 = smul.addr %s1806, 2
        %s1808 = smul.addr %s1804, 32
        %s1809 = sadd.s32 %s1807, %s1808
        %s1810 = smul.addr %s1809, 8
        %s1811 = scalar_lea.vmem %s3, %s1810
        %s1812 = sand.u32 %s139, 1
        %s1813 = scalar_lea.sflag [#allocation3], %s1812
        %s1814 = sand.u32 %s139, 1
        %s1815 = smul.addr %s1814, 32
        %s1816 = scalar_lea.vmem [#allocation2], %s1815
        // Predicated region
        $region33: #{tpu_custom_call.1} parent=31 // pred_check
          %p1817 = pneg %p121
        $region34: #{tpu_custom_call.1} parent=31 // pred_check_branch
          %1819 = sbr.rel (%p1817) target = $region36
        $region35: #{tpu_custom_call.1} parent=31 // pred_region
          %s1820 = smul.u32 8, %s24
        $region36: #{tpu_custom_call.1} parent=31 // pred_fallthru
          _
        // Predicated region
        $region37: #{tpu_custom_call.1} parent=31 // pred_check
          %p1821 = pneg %p149
        $region38: #{tpu_custom_call.1} parent=31 // pred_check_branch
          %1823 = sbr.rel (%p1821) target = $region40
        $region39: #{tpu_custom_call.1} parent=31 // pred_region
          %s1824 = smul.u32 4, %s24
          %s1826 = ssub.s32 512, 512
          %1827 = vsyncadd %s1813, %s1826
          %s1828 = smul.addr %s23, 8
          %s1829 = sadd.s32 %s1824, %s1828
          %s1830 = smul.addr %s1829, 128
          %s1831 = scalar_lea.hbm %s4, %s1830
          %s1832 = sshll.u32 %s1816, 4
          %s1833 = int_to_ptr.vmem [resolvable:$true] %s1832
          %1838 = dma.vmem_to_hbm [thread:$0]  %s1833, 512, %s1831, %s1813, 128, 128, 8
        $region40: #{tpu_custom_call.1} parent=31 // pred_fallthru
          _
      $region32: #{tpu_custom_call.1} parent=5 // pred_fallthru
        _
      %p1839 = scmp.le.s32.totalorder 2, %s14
      // Predicated region
      $region41: #{tpu_custom_call.1} parent=5 // pred_check
        %p1840 = pneg %p1839
      $region42: #{tpu_custom_call.1} parent=5 // pred_check_branch
        %1842 = sbr.rel (%p1840) target = $region44
      $region43: #{tpu_custom_call.1} parent=5 // pred_region
        %s1843 = ssub.s32 %s14, 2
        // Predicated region
        $region45: #{tpu_custom_call.1} parent=43 // pred_check
          %p1844 = pneg %p127
        $region46: #{tpu_custom_call.1} parent=43 // pred_check_branch
          %1846 = sbr.rel (%p1844) target = $region48
        $region47: #{tpu_custom_call.1} parent=43 // pred_region
          %s1847 = smul.u32 8, %s26
          %p1848 = scmp.lt.s32.totalorder %s25, 1
          %s1849 = scalar_select %p1848, %s25, 1
          %p1850 = scmp.lt.s32.totalorder %s1847, 15
          %s1851 = scalar_select %p1850, %s1847, 15
          %s1852 = smul.addr %s1851, 2
          %s1853 = smul.addr %s1849, 32
          %s1854 = sadd.s32 %s1852, %s1853
          %s1855 = smul.addr %s1854, 8
          %s1856 = scalar_lea.vmem %s3, %s1855
        $region48: #{tpu_custom_call.1} parent=43 // pred_fallthru
          _
        // Predicated region
        $region49: #{tpu_custom_call.1} parent=43 // pred_check
          %p1857 = pneg %p155
        $region50: #{tpu_custom_call.1} parent=43 // pred_check_branch
          %1859 = sbr.rel (%p1857) target = $region52
        $region51: #{tpu_custom_call.1} parent=43 // pred_region
          %s1860 = sand.u32 %s140, 1
          %s1861 = scalar_lea.sflag [#allocation3], %s1860
          %s1862 = sand.u32 %s140, 1
          %s1863 = smul.addr %s1862, 32
          %s1864 = scalar_lea.vmem [#allocation2], %s1863
          %1865 = dma.done %s1861, 512
        $region52: #{tpu_custom_call.1} parent=43 // pred_fallthru
          _
      $region44: #{tpu_custom_call.1} parent=5 // pred_fallthru
        _
    $region6: #{tpu_custom_call.1} parent=1 // loop_footer
      %s18 = sadd.s32 1, %s14
    $region7: #{tpu_custom_call.1} parent=1 // loop_footer_branch
      %13 = sbr.rel target = $region3
    $region8: #{tpu_custom_call.1} parent=1 // loop_exit
      _
    %1866 = vsyncpa [#allocation3], 1
    %s1867 = scalar_lea.sflag [#allocation3], 1
    %1868 = vsyncpa %s1867, 1

</llo_original>
